<compile_context>
chip_gen: v5e
topology: v5e:2x2
jax: 0.10.0
libtpu: 0.0.40
codegen_flags: <defaults>
</compile_context>

<pallas_src>
import jax
import jax.numpy as jnp
from jax import lax
from jax.experimental import pallas as pl
from jax.experimental.pallas import tpu as pltpu

_BN_EPS = 1e-5
_PAD = 8  # sublane-aligned zero guard at each end of the flattened-y scratch


def _bottleneck_kernel(x_ref, w1_ref, s1_ref, b1_ref,
                       w2_ref, s2_ref, b2_ref,
                       w3_ref, s3_ref, b3_ref,
                       o_ref, ypad_ref):
    # x_ref block: (1, H, W, Cin) -- full image, resident across the row axis.
    # o_ref block: (1, TH, W, Cout) -- one row tile of the output.
    _, H, W, Cin = x_ref.shape
    _, TH, _, Cout = o_ref.shape
    Cm = w1_ref.shape[1]
    THW = TH * W
    f32 = jnp.float32

    h = pl.program_id(1)
    n_row_tiles = pl.num_programs(1)
    r0 = pl.multiple_of(h * TH, TH)          # first output row of this tile

    def conv1(rows2d):                       # (R, Cin) -> (R, Cm): 1x1+bn1+relu
        y = jnp.dot(rows2d, w1_ref[...], preferred_element_type=f32)
        return jnp.maximum(y * s1_ref[...] + b1_ref[...], 0.0)

    # ---- stage 1: conv1 on rows r0-1 .. r0+TH, written into the zero-padded
    #      flattened scratch (out-of-image halo rows are zeroed, so conv2
    #      needs no vertical masking).
    tail = _PAD + (TH + 2) * W
    ypad_ref[0:_PAD, :] = jnp.zeros((_PAD, Cm), f32)
    ypad_ref[tail:tail + _PAD, :] = jnp.zeros((_PAD, Cm), f32)

    # NOTE: keep W (and hence TH*W) a multiple of 8 so this reshape is a free
    # sublane-aligned layout merge (true for every real ResNet stage).
    x_tile = x_ref[0, pl.ds(r0, TH), :, :].reshape(THW, Cin)
    ypad_ref[_PAD + W:_PAD + (TH + 1) * W, :] = conv1(x_tile)

    @pl.when(h > 0)
    def _():
        xr = x_ref[0, pl.ds(r0 - 1, 1), :, :].reshape(W, Cin)
        ypad_ref[_PAD:_PAD + W, :] = conv1(xr)

    @pl.when(h == 0)
    def _():
        ypad_ref[_PAD:_PAD + W, :] = jnp.zeros((W, Cm), f32)

    @pl.when(h < n_row_tiles - 1)
    def _():
        xr = x_ref[0, pl.ds(r0 + TH, 1), :, :].reshape(W, Cin)
        ypad_ref[_PAD + (TH + 1) * W:tail, :] = conv1(xr)

    @pl.when(h == n_row_tiles - 1)
    def _():
        ypad_ref[_PAD + (TH + 1) * W:tail, :] = jnp.zeros((W, Cm), f32)

    # ---- stage 2: conv2 (3x3, pad=1, stride=1) + bn2 + relu.
    # Grouped im2col: per kernel row kh, concat the 3 column taps on the
    # channel axis -> one (THW, 3*Cm) x (3*Cm, Cm) matmul (3 total).
    # Only the dw=+-1 column-wrap taps need masking; the masks are built once.
    col = lax.broadcasted_iota(jnp.int32, (THW, 1), 0) % W
    mask_l = col > 0            # valid positions for the dw = -1 tap
    mask_r = col < (W - 1)      # valid positions for the dw = +1 tap

    acc = jnp.zeros((THW, Cm), f32)
    for kh in range(3):
        base = _PAD + kh * W    # static offsets into the padded scratch
        left = jnp.where(mask_l, ypad_ref[base - 1:base - 1 + THW, :], 0.0)
        mid = ypad_ref[base:base + THW, :]
        right = jnp.where(mask_r, ypad_ref[base + 1:base + 1 + THW, :], 0.0)
        patch = jnp.concatenate([left, mid, right], axis=1)   # (THW, 3*Cm)
        acc = acc + jnp.dot(patch, w2_ref[kh], preferred_element_type=f32)
    y2 = jnp.maximum(acc * s2_ref[...] + b2_ref[...], 0.0)

    # ---- stage 3: conv3 (1x1) + bn3, identity residual, final relu.
    y3 = jnp.dot(y2, w3_ref[...], preferred_element_type=f32)
    y3 = y3 * s3_ref[...] + b3_ref[...]
    out = jnp.maximum(y3 + x_tile.astype(f32), 0.0)
    o_ref[...] = out.astype(o_ref.dtype).reshape(1, TH, W, Cout)


def _vmem_limit_bytes():
    try:
        info = pltpu.get_tpu_info()
        cap = getattr(info, "vmem_capacity_bytes", None)
        if cap:
            return min(int(cap) * 3 // 4, 96 * 1024 * 1024)
    except Exception:
        pass
    return 48 * 1024 * 1024


def bottleneck_forward_nhwc(x_nhwc, params, *, row_tile=None):
    """x_nhwc: (N, H, W, Cin). Returns (N, H, W, Cout) in NHWC."""
    w1, s1, b1, w2, s2, b2, w3, s3, b3 = params
    N, H, W, Cin = x_nhwc.shape
    Cm = w1.shape[1]
    Cout = w3.shape[1]
    assert Cin == Cout, "identity residual requires inplanes == planes*4"

    if row_tile is None:
        if H <= 8:
            row_tile = H
        else:
            row_tile = next((t for t in (8, 7, 4, 2, 1) if H % t == 0), 1)
    TH = row_tile
    assert H % TH == 0, "row_tile must divide H"

    out = pl.pallas_call(
        _bottleneck_kernel,
        out_shape=jax.ShapeDtypeStruct((N, H, W, Cout), x_nhwc.dtype),
        grid_spec=pltpu.PrefetchScalarGridSpec(
            num_scalar_prefetch=0,
            grid=(N, H // TH),
            in_specs=[
                # full image resident per n (block index ignores the row axis)
                pl.BlockSpec((1, H, W, Cin), lambda n, h: (n, 0, 0, 0)),
                pl.BlockSpec((Cin, Cm), lambda n, h: (0, 0)),
                pl.BlockSpec((1, Cm), lambda n, h: (0, 0)),
                pl.BlockSpec((1, Cm), lambda n, h: (0, 0)),
                pl.BlockSpec((3, 3 * Cm, Cm), lambda n, h: (0, 0, 0)),
                pl.BlockSpec((1, Cm), lambda n, h: (0, 0)),
                pl.BlockSpec((1, Cm), lambda n, h: (0, 0)),
                pl.BlockSpec((Cm, Cout), lambda n, h: (0, 0)),
                pl.BlockSpec((1, Cout), lambda n, h: (0, 0)),
                pl.BlockSpec((1, Cout), lambda n, h: (0, 0)),
            ],
            out_specs=pl.BlockSpec((1, TH, W, Cout), lambda n, h: (n, h, 0, 0)),
            scratch_shapes=[
                pltpu.VMEM((2 * _PAD + (TH + 2) * W, Cm), jnp.float32),
            ],
        ),
        compiler_params=pltpu.CompilerParams(
            dimension_semantics=("parallel", "parallel"),
            vmem_limit_bytes=_vmem_limit_bytes(),
        ),
    )(x_nhwc, w1, s1, b1, w2, s2, b2, w3, s3, b3)
    return out


def bottleneck_forward(x_nchw, params, *, row_tile=None):
    """PyTorch-layout wrapper: (N, C, H, W) in / out.

    NOTE: the two transposes here are boundary layout plumbing for parity with
    the PyTorch module; prefer `bottleneck_forward_nhwc` and keep activations
    NHWC across blocks so no transpose hits HBM in the hot path."""
    x = jnp.transpose(x_nchw, (0, 2, 3, 1)).astype(jnp.float32)
    out = bottleneck_forward_nhwc(x, params, row_tile=row_tile)
    return jnp.transpose(out, (0, 3, 1, 2))


def _fold_bn(gamma, beta, mean, var):
    scale = gamma / jnp.sqrt(var + _BN_EPS)
    bias = beta - mean * scale
    return scale[None, :], bias[None, :]          # (1, C) each


def make_params(key, inplanes, planes):
    """Deterministic synthetic parameters, shapes per Bottleneck.__init__."""
    width = planes           # base_width=64, cardinality=1, reduce_first=1
    outplanes = planes * 4   # expansion
    ks = jax.random.split(key, 15)

    # PyTorch conv weights are OIHW; convert to matmul-friendly matrices.
    w1_t = 0.1 * jax.random.normal(ks[0], (width, inplanes, 1, 1), jnp.float32)
    w2_t = 0.1 * jax.random.normal(ks[1], (width, width, 3, 3), jnp.float32)
    w3_t = 0.1 * jax.random.normal(ks[2], (outplanes, width, 1, 1), jnp.float32)
    w1 = jnp.transpose(w1_t[:, :, 0, 0], (1, 0))                    # (Cin, Cm)
    # (kh, kw, in, out) -> grouped per kernel row: (3, 3*Cm, Cm), K = kw*Cm+in
    w2 = jnp.transpose(w2_t, (2, 3, 1, 0)).reshape(3, 3 * width, width)
    w3 = jnp.transpose(w3_t[:, :, 0, 0], (1, 0))                    # (Cm, Cout)

    def bn(kg, kb, km, kv, c):
        gamma = 1.0 + 0.1 * jax.random.normal(kg, (c,), jnp.float32)
        beta = 0.1 * jax.random.normal(kb, (c,), jnp.float32)
        mean = 0.1 * jax.random.normal(km, (c,), jnp.float32)
        var = 1.0 + 0.1 * jax.random.uniform(kv, (c,), jnp.float32)
        return _fold_bn(gamma, beta, mean, var)

    s1, b1 = bn(ks[3], ks[4], ks[5], ks[6], width)
    s2, b2 = bn(ks[7], ks[8], ks[9], ks[10], width)
    s3, b3 = bn(ks[11], ks[12], ks[13], ks[14], outplanes)
    return (w1, s1, b1, w2, s2, b2, w3, s3, b3)


def _reference_forward(x_nchw, params):
    """Pure-JAX reference (same math, NHWC), for a correctness check."""
    w1, s1, b1, w2, s2, b2, w3, s3, b3 = params
    x = jnp.transpose(x_nchw, (0, 2, 3, 1)).astype(jnp.float32)
    N, H, W, _ = x.shape
    Cm = w1.shape[1]
    y = jnp.maximum(jnp.einsum("nhwc,cd->nhwd", x, w1) * s1 + b1, 0.0)
    yp = jnp.pad(y, ((0, 0), (1, 1), (1, 1), (0, 0)))
    w2_taps = w2.reshape(3, 3, Cm, Cm)        # (kh, kw, in, out)
    acc = jnp.zeros(y.shape, jnp.float32)
    for kh in range(3):
        for kw in range(3):
            acc = acc + jnp.einsum("nhwc,cd->nhwd",
                                   yp[:, kh:kh + H, kw:kw + W, :],
                                   w2_taps[kh, kw])
    y2 = jnp.maximum(acc * s2 + b2, 0.0)
    y3 = jnp.einsum("nhwc,cd->nhwd", y2, w3) * s3 + b3
    out = jnp.maximum(y3 + x, 0.0)
    return jnp.transpose(out, (0, 3, 1, 2))


if __name__ == "__main__":
    # Small synthetic config: planes=4 -> width=4, outplanes=16; inplanes must
    # equal outplanes (identity residual), so inplanes=16.  row_tile=4 with
    # H=8 exercises both halo paths (top/interior/bottom row tiles).
    # NOTE: at this toy size the lane axis is mostly padding; perf numbers
    # here are meaningless -- use ResNet-scale channels (>=64/256) to measure.
    N, inplanes, planes, H, W = 2, 16, 4, 8, 8
    key = jax.random.PRNGKey(0)
    kx, kp = jax.random.split(key)
    x = jax.random.normal(kx, (N, inplanes, H, W), jnp.float32)
    params = make_params(kp, inplanes, planes)

    out = bottleneck_forward(x, params, row_tile=4)
    out = jax.block_until_ready(out)

    ref = _reference_forward(x, params)
    assert out.shape == (N, planes * 4, H, W)
    assert jnp.allclose(out, ref, atol=1e-4, rtol=1e-4), "mismatch vs reference"
    print("KERNEL_OK")
</pallas_src>

<mosaic_0001>
module attributes {stable_mosaic.version = 11 : i64} {
  func.func @_bottleneck_kernel(%arg0: i32, %arg1: i32, %arg2: memref<1x8x8x16xf32, #tpu.memory_space<vmem>>, %arg3: memref<16x4xf32, #tpu.memory_space<vmem>>, %arg4: memref<1x4xf32, #tpu.memory_space<vmem>>, %arg5: memref<1x4xf32, #tpu.memory_space<vmem>>, %arg6: memref<3x12x4xf32, #tpu.memory_space<vmem>>, %arg7: memref<1x4xf32, #tpu.memory_space<vmem>>, %arg8: memref<1x4xf32, #tpu.memory_space<vmem>>, %arg9: memref<4x16xf32, #tpu.memory_space<vmem>>, %arg10: memref<1x16xf32, #tpu.memory_space<vmem>>, %arg11: memref<1x16xf32, #tpu.memory_space<vmem>>, %arg12: memref<1x4x8x16xf32, #tpu.memory_space<vmem>>, %arg13: memref<64x4xf32, #tpu.memory_space<vmem>>) attributes {dimension_semantics = [#tpu.dimension_semantics<parallel>, #tpu.dimension_semantics<parallel>], iteration_bounds = array<i64: 2, 2>, scalar_prefetch = 0 : i64, scratch_operands = 1 : i64, tpu.core_type = #tpu.core_type<tc>, window_params = [{transform_indices = @transform_0, window_bounds = array<i64: 1, 8, 8, 16>}, {pipeline_mode = #tpu.pipeline_mode<synchronous>, transform_indices = @transform_1, window_bounds = array<i64: 16, 4>}, {pipeline_mode = #tpu.pipeline_mode<synchronous>, transform_indices = @transform_2, window_bounds = array<i64: 1, 4>}, {pipeline_mode = #tpu.pipeline_mode<synchronous>, transform_indices = @transform_3, window_bounds = array<i64: 1, 4>}, {pipeline_mode = #tpu.pipeline_mode<synchronous>, transform_indices = @transform_4, window_bounds = array<i64: 3, 12, 4>}, {pipeline_mode = #tpu.pipeline_mode<synchronous>, transform_indices = @transform_5, window_bounds = array<i64: 1, 4>}, {pipeline_mode = #tpu.pipeline_mode<synchronous>, transform_indices = @transform_6, window_bounds = array<i64: 1, 4>}, {pipeline_mode = #tpu.pipeline_mode<synchronous>, transform_indices = @transform_7, window_bounds = array<i64: 4, 16>}, {pipeline_mode = #tpu.pipeline_mode<synchronous>, transform_indices = @transform_8, window_bounds = array<i64: 1, 16>}, {pipeline_mode = #tpu.pipeline_mode<synchronous>, transform_indices = @transform_9, window_bounds = array<i64: 1, 16>}, {transform_indices = @transform_10, window_bounds = array<i64: 1, 4, 8, 16>}]} {
    %c4_i32 = arith.constant 4 : i32
    %0 = arith.muli %arg1, %c4_i32 : i32
    %1 = tpu.assume_multiple %0, 4 : i32
    %cst = arith.constant 0.000000e+00 : f32
    %2 = vector.broadcast %cst : f32 to vector<8x4xf32>
    %c0 = arith.constant 0 : index
    %c0_0 = arith.constant 0 : index
    %3 = vector.load %arg13[%c0, %c0_0] : memref<64x4xf32, #tpu.memory_space<vmem>>, vector<8x4xf32>
    tpu.vector_store %arg13[%c0, %c0_0], %2 {strides = array<i32>} : memref<64x4xf32, #tpu.memory_space<vmem>>, vector<8x4xf32>,
    %cst_1 = arith.constant 0.000000e+00 : f32
    %4 = vector.broadcast %cst_1 : f32 to vector<8x4xf32>
    %c56 = arith.constant 56 : index
    %c0_2 = arith.constant 0 : index
    %5 = vector.load %arg13[%c56, %c0_2] : memref<64x4xf32, #tpu.memory_space<vmem>>, vector<8x4xf32>
    tpu.vector_store %arg13[%c56, %c0_2], %4 {strides = array<i32>} : memref<64x4xf32, #tpu.memory_space<vmem>>, vector<8x4xf32>,
    %c0_3 = arith.constant 0 : index
    %6 = arith.index_cast %1 : i32 to index
    %c0_4 = arith.constant 0 : index
    %c0_5 = arith.constant 0 : index
    %7 = vector.load %arg2[%c0_3, %6, %c0_4, %c0_5] : memref<1x8x8x16xf32, #tpu.memory_space<vmem>>, vector<1x4x8x16xf32>
    %8 = vector.shape_cast %7 : vector<1x4x8x16xf32> to vector<4x8x16xf32>
    %9 = vector.shape_cast %8 : vector<4x8x16xf32> to vector<32x16xf32>
    %c0_6 = arith.constant 0 : index
    %c0_7 = arith.constant 0 : index
    %10 = vector.load %arg3[%c0_6, %c0_7] : memref<16x4xf32, #tpu.memory_space<vmem>>, vector<16x4xf32>
    %cst_8 = arith.constant dense<0.000000e+00> : vector<32x4xf32>
    %11 = tpu.matmul %9, %10, %cst_8 {dimension_numbers = #tpu.dot_dimension_numbers<[1], [0], [0], [1], [0, 0, 1, 1], [], []>} : vector<32x16xf32>, vector<16x4xf32>, vector<32x4xf32> -> vector<32x4xf32>
    %c0_9 = arith.constant 0 : index
    %c0_10 = arith.constant 0 : index
    %12 = vector.load %arg4[%c0_9, %c0_10] : memref<1x4xf32, #tpu.memory_space<vmem>>, vector<1x4xf32>
    %13 = vector.broadcast %12 : vector<1x4xf32> to vector<32x4xf32>
    %14 = arith.mulf %11, %13 : vector<32x4xf32>
    %c0_11 = arith.constant 0 : index
    %c0_12 = arith.constant 0 : index
    %15 = vector.load %arg5[%c0_11, %c0_12] : memref<1x4xf32, #tpu.memory_space<vmem>>, vector<1x4xf32>
    %16 = vector.broadcast %15 : vector<1x4xf32> to vector<32x4xf32>
    %17 = arith.addf %14, %16 : vector<32x4xf32>
    %cst_13 = arith.constant 0.000000e+00 : f32
    %18 = vector.broadcast %cst_13 : f32 to vector<32x4xf32>
    %19 = arith.maximumf %17, %18 : vector<32x4xf32>
    %c16 = arith.constant 16 : index
    %c0_14 = arith.constant 0 : index
    %20 = vector.load %arg13[%c16, %c0_14] : memref<64x4xf32, #tpu.memory_space<vmem>>, vector<32x4xf32>
    tpu.vector_store %arg13[%c16, %c0_14], %19 {strides = array<i32>} : memref<64x4xf32, #tpu.memory_space<vmem>>, vector<32x4xf32>,
    %c0_i32 = arith.constant 0 : i32
    %21 = arith.cmpi sgt, %arg1, %c0_i32 : i32
    %22 = arith.extui %21 : i1 to i32
    %c0_i32_15 = arith.constant 0 : i32
    %23 = arith.cmpi ne, %22, %c0_i32_15 : i32
    scf.if %23 {
      %c1_i32_71 = arith.constant 1 : i32
      %124 = arith.subi %1, %c1_i32_71 : i32
      %c0_72 = arith.constant 0 : index
      %125 = arith.index_cast %124 : i32 to index
      %c0_73 = arith.constant 0 : index
      %c0_74 = arith.constant 0 : index
      %126 = vector.load %arg2[%c0_72, %125, %c0_73, %c0_74] : memref<1x8x8x16xf32, #tpu.memory_space<vmem>>, vector<1x1x8x16xf32>
      %127 = vector.shape_cast %126 : vector<1x1x8x16xf32> to vector<1x8x16xf32>
      %128 = vector.shape_cast %127 : vector<1x8x16xf32> to vector<8x16xf32>
      %c0_75 = arith.constant 0 : index
      %c0_76 = arith.constant 0 : index
      %129 = vector.load %arg3[%c0_75, %c0_76] : memref<16x4xf32, #tpu.memory_space<vmem>>, vector<16x4xf32>
      %cst_77 = arith.constant dense<0.000000e+00> : vector<8x4xf32>
      %130 = tpu.matmul %128, %129, %cst_77 {dimension_numbers = #tpu.dot_dimension_numbers<[1], [0], [0], [1], [0, 0, 1, 1], [], []>} : vector<8x16xf32>, vector<16x4xf32>, vector<8x4xf32> -> vector<8x4xf32>
      %c0_78 = arith.constant 0 : index
      %c0_79 = arith.constant 0 : index
      %131 = vector.load %arg4[%c0_78, %c0_79] : memref<1x4xf32, #tpu.memory_space<vmem>>, vector<1x4xf32>
      %132 = vector.broadcast %131 : vector<1x4xf32> to vector<8x4xf32>
      %133 = arith.mulf %130, %132 : vector<8x4xf32>
      %c0_80 = arith.constant 0 : index
      %c0_81 = arith.constant 0 : index
      %134 = vector.load %arg5[%c0_80, %c0_81] : memref<1x4xf32, #tpu.memory_space<vmem>>, vector<1x4xf32>
      %135 = vector.broadcast %134 : vector<1x4xf32> to vector<8x4xf32>
      %136 = arith.addf %133, %135 : vector<8x4xf32>
      %cst_82 = arith.constant 0.000000e+00 : f32
      %137 = vector.broadcast %cst_82 : f32 to vector<8x4xf32>
      %138 = arith.maximumf %136, %137 : vector<8x4xf32>
      %c8_83 = arith.constant 8 : index
      %c0_84 = arith.constant 0 : index
      %139 = vector.load %arg13[%c8_83, %c0_84] : memref<64x4xf32, #tpu.memory_space<vmem>>, vector<8x4xf32>
      tpu.vector_store %arg13[%c8_83, %c0_84], %138 {strides = array<i32>} : memref<64x4xf32, #tpu.memory_space<vmem>>, vector<8x4xf32>,
    } else {
    }
    %c0_i32_16 = arith.constant 0 : i32
    %24 = arith.cmpi eq, %arg1, %c0_i32_16 : i32
    %25 = arith.extui %24 : i1 to i32
    %c0_i32_17 = arith.constant 0 : i32
    %26 = arith.cmpi ne, %25, %c0_i32_17 : i32
    scf.if %26 {
      %cst_71 = arith.constant 0.000000e+00 : f32
      %124 = vector.broadcast %cst_71 : f32 to vector<8x4xf32>
      %c8_72 = arith.constant 8 : index
      %c0_73 = arith.constant 0 : index
      %125 = vector.load %arg13[%c8_72, %c0_73] : memref<64x4xf32, #tpu.memory_space<vmem>>, vector<8x4xf32>
      tpu.vector_store %arg13[%c8_72, %c0_73], %124 {strides = array<i32>} : memref<64x4xf32, #tpu.memory_space<vmem>>, vector<8x4xf32>,
    } else {
    }
    %c1_i32 = arith.constant 1 : i32
    %27 = arith.cmpi slt, %arg1, %c1_i32 : i32
    %28 = arith.extui %27 : i1 to i32
    %c0_i32_18 = arith.constant 0 : i32
    %29 = arith.cmpi ne, %28, %c0_i32_18 : i32
    scf.if %29 {
      %c4_i32_71 = arith.constant 4 : i32
      %124 = arith.addi %1, %c4_i32_71 : i32
      %c0_72 = arith.constant 0 : index
      %125 = arith.index_cast %124 : i32 to index
      %c0_73 = arith.constant 0 : index
      %c0_74 = arith.constant 0 : index
      %126 = vector.load %arg2[%c0_72, %125, %c0_73, %c0_74] : memref<1x8x8x16xf32, #tpu.memory_space<vmem>>, vector<1x1x8x16xf32>
      %127 = vector.shape_cast %126 : vector<1x1x8x16xf32> to vector<1x8x16xf32>
      %128 = vector.shape_cast %127 : vector<1x8x16xf32> to vector<8x16xf32>
      %c0_75 = arith.constant 0 : index
      %c0_76 = arith.constant 0 : index
      %129 = vector.load %arg3[%c0_75, %c0_76] : memref<16x4xf32, #tpu.memory_space<vmem>>, vector<16x4xf32>
      %cst_77 = arith.constant dense<0.000000e+00> : vector<8x4xf32>
      %130 = tpu.matmul %128, %129, %cst_77 {dimension_numbers = #tpu.dot_dimension_numbers<[1], [0], [0], [1], [0, 0, 1, 1], [], []>} : vector<8x16xf32>, vector<16x4xf32>, vector<8x4xf32> -> vector<8x4xf32>
      %c0_78 = arith.constant 0 : index
      %c0_79 = arith.constant 0 : index
      %131 = vector.load %arg4[%c0_78, %c0_79] : memref<1x4xf32, #tpu.memory_space<vmem>>, vector<1x4xf32>
      %132 = vector.broadcast %131 : vector<1x4xf32> to vector<8x4xf32>
      %133 = arith.mulf %130, %132 : vector<8x4xf32>
      %c0_80 = arith.constant 0 : index
      %c0_81 = arith.constant 0 : index
      %134 = vector.load %arg5[%c0_80, %c0_81] : memref<1x4xf32, #tpu.memory_space<vmem>>, vector<1x4xf32>
      %135 = vector.broadcast %134 : vector<1x4xf32> to vector<8x4xf32>
      %136 = arith.addf %133, %135 : vector<8x4xf32>
      %cst_82 = arith.constant 0.000000e+00 : f32
      %137 = vector.broadcast %cst_82 : f32 to vector<8x4xf32>
      %138 = arith.maximumf %136, %137 : vector<8x4xf32>
      %c48 = arith.constant 48 : index
      %c0_83 = arith.constant 0 : index
      %139 = vector.load %arg13[%c48, %c0_83] : memref<64x4xf32, #tpu.memory_space<vmem>>, vector<8x4xf32>
      tpu.vector_store %arg13[%c48, %c0_83], %138 {strides = array<i32>} : memref<64x4xf32, #tpu.memory_space<vmem>>, vector<8x4xf32>,
    } else {
    }
    %c1_i32_19 = arith.constant 1 : i32
    %30 = arith.cmpi eq, %arg1, %c1_i32_19 : i32
    %31 = arith.extui %30 : i1 to i32
    %c0_i32_20 = arith.constant 0 : i32
    %32 = arith.cmpi ne, %31, %c0_i32_20 : i32
    scf.if %32 {
      %cst_71 = arith.constant 0.000000e+00 : f32
      %124 = vector.broadcast %cst_71 : f32 to vector<8x4xf32>
      %c48 = arith.constant 48 : index
      %c0_72 = arith.constant 0 : index
      %125 = vector.load %arg13[%c48, %c0_72] : memref<64x4xf32, #tpu.memory_space<vmem>>, vector<8x4xf32>
      tpu.vector_store %arg13[%c48, %c0_72], %124 {strides = array<i32>} : memref<64x4xf32, #tpu.memory_space<vmem>>, vector<8x4xf32>,
    } else {
    }
    %33 = tpu.iota {dimensions = array<i32: 0>} : vector<32x1xi32>
    %c8_i32 = arith.constant 8 : i32
    %c0_i32_21 = arith.constant 0 : i32
    %34 = arith.cmpi eq, %c8_i32, %c0_i32_21 : i32
    %c1_i32_22 = arith.constant 1 : i32
    %35 = arith.select %34, %c1_i32_22, %c8_i32 : i32
    %36 = vector.broadcast %35 : i32 to vector<32x1xi32>
    %37 = arith.remsi %33, %36 : vector<32x1xi32>
    %c0_i32_23 = arith.constant 0 : i32
    %38 = vector.broadcast %c0_i32_23 : i32 to vector<32x1xi32>
    %39 = arith.cmpi ne, %37, %38 : vector<32x1xi32>
    %c0_i32_24 = arith.constant 0 : i32
    %40 = vector.broadcast %c0_i32_24 : i32 to vector<32x1xi32>
    %41 = arith.cmpi slt, %37, %40 : vector<32x1xi32>
    %c0_i32_25 = arith.constant 0 : i32
    %42 = arith.cmpi slt, %35, %c0_i32_25 : i32
    %43 = vector.broadcast %42 : i1 to vector<32x1xi1>
    %44 = vector.broadcast %43 : vector<32x1xi1> to vector<32x1xi1>
    %45 = arith.xori %41, %44 : vector<32x1xi1>
    %46 = arith.andi %45, %39 : vector<32x1xi1>
    %47 = vector.broadcast %35 : i32 to vector<32x1xi32>
    %48 = arith.addi %37, %47 : vector<32x1xi32>
    %49 = arith.select %46, %48, %37 : vector<32x1xi1>, vector<32x1xi32>
    %c0_i32_26 = arith.constant 0 : i32
    %50 = vector.broadcast %c0_i32_26 : i32 to vector<32x1xi32>
    %51 = arith.cmpi sgt, %49, %50 : vector<32x1xi32>
    %c7_i32 = arith.constant 7 : i32
    %52 = vector.broadcast %c7_i32 : i32 to vector<32x1xi32>
    %53 = arith.cmpi slt, %49, %52 : vector<32x1xi32>
    %cst_27 = arith.constant 0.000000e+00 : f32
    %54 = vector.broadcast %cst_27 : f32 to vector<32x4xf32>
    %c7 = arith.constant 7 : index
    %c0_28 = arith.constant 0 : index
    %55 = vector.load %arg13[%c7, %c0_28] : memref<64x4xf32, #tpu.memory_space<vmem>>, vector<32x4xf32>
    %cst_29 = arith.constant 0.000000e+00 : f32
    %56 = vector.shape_cast %51 : vector<32x1xi1> to vector<32x1xi1>
    %57 = vector.broadcast %56 : vector<32x1xi1> to vector<32x4xi1>
    %58 = vector.broadcast %cst_29 : f32 to vector<32x4xf32>
    %59 = arith.select %57, %55, %58 : vector<32x4xi1>, vector<32x4xf32>
    %c8 = arith.constant 8 : index
    %c0_30 = arith.constant 0 : index
    %60 = vector.load %arg13[%c8, %c0_30] : memref<64x4xf32, #tpu.memory_space<vmem>>, vector<32x4xf32>
    %c9 = arith.constant 9 : index
    %c0_31 = arith.constant 0 : index
    %61 = vector.load %arg13[%c9, %c0_31] : memref<64x4xf32, #tpu.memory_space<vmem>>, vector<32x4xf32>
    %cst_32 = arith.constant 0.000000e+00 : f32
    %62 = vector.shape_cast %53 : vector<32x1xi1> to vector<32x1xi1>
    %63 = vector.broadcast %62 : vector<32x1xi1> to vector<32x4xi1>
    %64 = vector.broadcast %cst_32 : f32 to vector<32x4xf32>
    %65 = arith.select %63, %61, %64 : vector<32x4xi1>, vector<32x4xf32>
    %66 = tpu.concatenate %59, %60, %65 in 1 : vector<32x4xf32>, vector<32x4xf32>, vector<32x4xf32> -> vector<32x12xf32>
    %c0_33 = arith.constant 0 : index
    %c0_34 = arith.constant 0 : index
    %c0_35 = arith.constant 0 : index
    %67 = vector.load %arg6[%c0_33, %c0_34, %c0_35] : memref<3x12x4xf32, #tpu.memory_space<vmem>>, vector<1x12x4xf32>
    %68 = vector.shape_cast %67 : vector<1x12x4xf32> to vector<12x4xf32>
    %cst_36 = arith.constant dense<0.000000e+00> : vector<32x4xf32>
    %69 = tpu.matmul %66, %68, %cst_36 {dimension_numbers = #tpu.dot_dimension_numbers<[1], [0], [0], [1], [0, 0, 1, 1], [], []>} : vector<32x12xf32>, vector<12x4xf32>, vector<32x4xf32> -> vector<32x4xf32>
    %70 = arith.addf %54, %69 : vector<32x4xf32>
    %c15 = arith.constant 15 : index
    %c0_37 = arith.constant 0 : index
    %71 = vector.load %arg13[%c15, %c0_37] : memref<64x4xf32, #tpu.memory_space<vmem>>, vector<32x4xf32>
    %cst_38 = arith.constant 0.000000e+00 : f32
    %72 = vector.shape_cast %51 : vector<32x1xi1> to vector<32x1xi1>
    %73 = vector.broadcast %72 : vector<32x1xi1> to vector<32x4xi1>
    %74 = vector.broadcast %cst_38 : f32 to vector<32x4xf32>
    %75 = arith.select %73, %71, %74 : vector<32x4xi1>, vector<32x4xf32>
    %c16_39 = arith.constant 16 : index
    %c0_40 = arith.constant 0 : index
    %76 = vector.load %arg13[%c16_39, %c0_40] : memref<64x4xf32, #tpu.memory_space<vmem>>, vector<32x4xf32>
    %c17 = arith.constant 17 : index
    %c0_41 = arith.constant 0 : index
    %77 = vector.load %arg13[%c17, %c0_41] : memref<64x4xf32, #tpu.memory_space<vmem>>, vector<32x4xf32>
    %cst_42 = arith.constant 0.000000e+00 : f32
    %78 = vector.shape_cast %53 : vector<32x1xi1> to vector<32x1xi1>
    %79 = vector.broadcast %78 : vector<32x1xi1> to vector<32x4xi1>
    %80 = vector.broadcast %cst_42 : f32 to vector<32x4xf32>
    %81 = arith.select %79, %77, %80 : vector<32x4xi1>, vector<32x4xf32>
    %82 = tpu.concatenate %75, %76, %81 in 1 : vector<32x4xf32>, vector<32x4xf32>, vector<32x4xf32> -> vector<32x12xf32>
    %c1 = arith.constant 1 : index
    %c0_43 = arith.constant 0 : index
    %c0_44 = arith.constant 0 : index
    %83 = vector.load %arg6[%c1, %c0_43, %c0_44] : memref<3x12x4xf32, #tpu.memory_space<vmem>>, vector<1x12x4xf32>
    %84 = vector.shape_cast %83 : vector<1x12x4xf32> to vector<12x4xf32>
    %cst_45 = arith.constant dense<0.000000e+00> : vector<32x4xf32>
    %85 = tpu.matmul %82, %84, %cst_45 {dimension_numbers = #tpu.dot_dimension_numbers<[1], [0], [0], [1], [0, 0, 1, 1], [], []>} : vector<32x12xf32>, vector<12x4xf32>, vector<32x4xf32> -> vector<32x4xf32>
    %86 = arith.addf %70, %85 : vector<32x4xf32>
    %c23 = arith.constant 23 : index
    %c0_46 = arith.constant 0 : index
    %87 = vector.load %arg13[%c23, %c0_46] : memref<64x4xf32, #tpu.memory_space<vmem>>, vector<32x4xf32>
    %cst_47 = arith.constant 0.000000e+00 : f32
    %88 = vector.shape_cast %51 : vector<32x1xi1> to vector<32x1xi1>
    %89 = vector.broadcast %88 : vector<32x1xi1> to vector<32x4xi1>
    %90 = vector.broadcast %cst_47 : f32 to vector<32x4xf32>
    %91 = arith.select %89, %87, %90 : vector<32x4xi1>, vector<32x4xf32>
    %c24 = arith.constant 24 : index
    %c0_48 = arith.constant 0 : index
    %92 = vector.load %arg13[%c24, %c0_48] : memref<64x4xf32, #tpu.memory_space<vmem>>, vector<32x4xf32>
    %c25 = arith.constant 25 : index
    %c0_49 = arith.constant 0 : index
    %93 = vector.load %arg13[%c25, %c0_49] : memref<64x4xf32, #tpu.memory_space<vmem>>, vector<32x4xf32>
    %cst_50 = arith.constant 0.000000e+00 : f32
    %94 = vector.shape_cast %53 : vector<32x1xi1> to vector<32x1xi1>
    %95 = vector.broadcast %94 : vector<32x1xi1> to vector<32x4xi1>
    %96 = vector.broadcast %cst_50 : f32 to vector<32x4xf32>
    %97 = arith.select %95, %93, %96 : vector<32x4xi1>, vector<32x4xf32>
    %98 = tpu.concatenate %91, %92, %97 in 1 : vector<32x4xf32>, vector<32x4xf32>, vector<32x4xf32> -> vector<32x12xf32>
    %c2 = arith.constant 2 : index
    %c0_51 = arith.constant 0 : index
    %c0_52 = arith.constant 0 : index
    %99 = vector.load %arg6[%c2, %c0_51, %c0_52] : memref<3x12x4xf32, #tpu.memory_space<vmem>>, vector<1x12x4xf32>
    %100 = vector.shape_cast %99 : vector<1x12x4xf32> to vector<12x4xf32>
    %cst_53 = arith.constant dense<0.000000e+00> : vector<32x4xf32>
    %101 = tpu.matmul %98, %100, %cst_53 {dimension_numbers = #tpu.dot_dimension_numbers<[1], [0], [0], [1], [0, 0, 1, 1], [], []>} : vector<32x12xf32>, vector<12x4xf32>, vector<32x4xf32> -> vector<32x4xf32>
    %102 = arith.addf %86, %101 : vector<32x4xf32>
    %c0_54 = arith.constant 0 : index
    %c0_55 = arith.constant 0 : index
    %103 = vector.load %arg7[%c0_54, %c0_55] : memref<1x4xf32, #tpu.memory_space<vmem>>, vector<1x4xf32>
    %104 = vector.broadcast %103 : vector<1x4xf32> to vector<32x4xf32>
    %105 = arith.mulf %102, %104 : vector<32x4xf32>
    %c0_56 = arith.constant 0 : index
    %c0_57 = arith.constant 0 : index
    %106 = vector.load %arg8[%c0_56, %c0_57] : memref<1x4xf32, #tpu.memory_space<vmem>>, vector<1x4xf32>
    %107 = vector.broadcast %106 : vector<1x4xf32> to vector<32x4xf32>
    %108 = arith.addf %105, %107 : vector<32x4xf32>
    %cst_58 = arith.constant 0.000000e+00 : f32
    %109 = vector.broadcast %cst_58 : f32 to vector<32x4xf32>
    %110 = arith.maximumf %108, %109 : vector<32x4xf32>
    %c0_59 = arith.constant 0 : index
    %c0_60 = arith.constant 0 : index
    %111 = vector.load %arg9[%c0_59, %c0_60] : memref<4x16xf32, #tpu.memory_space<vmem>>, vector<4x16xf32>
    %cst_61 = arith.constant dense<0.000000e+00> : vector<32x16xf32>
    %112 = tpu.matmul %110, %111, %cst_61 {dimension_numbers = #tpu.dot_dimension_numbers<[1], [0], [0], [1], [0, 0, 1, 1], [], []>} : vector<32x4xf32>, vector<4x16xf32>, vector<32x16xf32> -> vector<32x16xf32>
    %c0_62 = arith.constant 0 : index
    %c0_63 = arith.constant 0 : index
    %113 = vector.load %arg10[%c0_62, %c0_63] : memref<1x16xf32, #tpu.memory_space<vmem>>, vector<1x16xf32>
    %114 = vector.broadcast %113 : vector<1x16xf32> to vector<32x16xf32>
    %115 = arith.mulf %112, %114 : vector<32x16xf32>
    %c0_64 = arith.constant 0 : index
    %c0_65 = arith.constant 0 : index
    %116 = vector.load %arg11[%c0_64, %c0_65] : memref<1x16xf32, #tpu.memory_space<vmem>>, vector<1x16xf32>
    %117 = vector.broadcast %116 : vector<1x16xf32> to vector<32x16xf32>
    %118 = arith.addf %115, %117 : vector<32x16xf32>
    %119 = arith.addf %118, %9 : vector<32x16xf32>
    %cst_66 = arith.constant 0.000000e+00 : f32
    %120 = vector.broadcast %cst_66 : f32 to vector<32x16xf32>
    %121 = arith.maximumf %119, %120 : vector<32x16xf32>
    %122 = vector.shape_cast %121 : vector<32x16xf32> to vector<1x4x8x16xf32>
    %c0_67 = arith.constant 0 : index
    %c0_68 = arith.constant 0 : index
    %c0_69 = arith.constant 0 : index
    %c0_70 = arith.constant 0 : index
    %123 = vector.load %arg12[%c0_67, %c0_68, %c0_69, %c0_70] : memref<1x4x8x16xf32, #tpu.memory_space<vmem>>, vector<1x4x8x16xf32>
    tpu.vector_store %arg12[%c0_67, %c0_68, %c0_69, %c0_70], %122 {strides = array<i32>} : memref<1x4x8x16xf32, #tpu.memory_space<vmem>>, vector<1x4x8x16xf32>,
    return
  }
  func.func @transform_0(%arg0: i32, %arg1: i32) -> (i32, i32, i32, i32) {
    %c0_i32 = arith.constant 0 : i32
    %c0_i32_0 = arith.constant 0 : i32
    %c0_i32_1 = arith.constant 0 : i32
    %c0_i32_2 = arith.constant 0 : i32
    return %arg0, %c0_i32, %c0_i32_0, %c0_i32_1 : i32, i32, i32, i32
  }
  func.func @transform_1(%arg0: i32, %arg1: i32) -> (i32, i32) {
    %c0_i32 = arith.constant 0 : i32
    %c0_i32_0 = arith.constant 0 : i32
    %c0_i32_1 = arith.constant 0 : i32
    return %c0_i32, %c0_i32_0 : i32, i32
  }
  func.func @transform_2(%arg0: i32, %arg1: i32) -> (i32, i32) {
    %c0_i32 = arith.constant 0 : i32
    %c0_i32_0 = arith.constant 0 : i32
    %c0_i32_1 = arith.constant 0 : i32
    return %c0_i32, %c0_i32_0 : i32, i32
  }
  func.func @transform_3(%arg0: i32, %arg1: i32) -> (i32, i32) {
    %c0_i32 = arith.constant 0 : i32
    %c0_i32_0 = arith.constant 0 : i32
    %c0_i32_1 = arith.constant 0 : i32
    return %c0_i32, %c0_i32_0 : i32, i32
  }
  func.func @transform_4(%arg0: i32, %arg1: i32) -> (i32, i32, i32) {
    %c0_i32 = arith.constant 0 : i32
    %c0_i32_0 = arith.constant 0 : i32
    %c0_i32_1 = arith.constant 0 : i32
    %c0_i32_2 = arith.constant 0 : i32
    return %c0_i32, %c0_i32_0, %c0_i32_1 : i32, i32, i32
  }
  func.func @transform_5(%arg0: i32, %arg1: i32) -> (i32, i32) {
    %c0_i32 = arith.constant 0 : i32
    %c0_i32_0 = arith.constant 0 : i32
    %c0_i32_1 = arith.constant 0 : i32
    return %c0_i32, %c0_i32_0 : i32, i32
  }
  func.func @transform_6(%arg0: i32, %arg1: i32) -> (i32, i32) {
    %c0_i32 = arith.constant 0 : i32
    %c0_i32_0 = arith.constant 0 : i32
    %c0_i32_1 = arith.constant 0 : i32
    return %c0_i32, %c0_i32_0 : i32, i32
  }
  func.func @transform_7(%arg0: i32, %arg1: i32) -> (i32, i32) {
    %c0_i32 = arith.constant 0 : i32
    %c0_i32_0 = arith.constant 0 : i32
    %c0_i32_1 = arith.constant 0 : i32
    return %c0_i32, %c0_i32_0 : i32, i32
  }
  func.func @transform_8(%arg0: i32, %arg1: i32) -> (i32, i32) {
    %c0_i32 = arith.constant 0 : i32
    %c0_i32_0 = arith.constant 0 : i32
    %c0_i32_1 = arith.constant 0 : i32
    return %c0_i32, %c0_i32_0 : i32, i32
  }
  func.func @transform_9(%arg0: i32, %arg1: i32) -> (i32, i32) {
    %c0_i32 = arith.constant 0 : i32
    %c0_i32_0 = arith.constant 0 : i32
    %c0_i32_1 = arith.constant 0 : i32
    return %c0_i32, %c0_i32_0 : i32, i32
  }
  func.func @transform_10(%arg0: i32, %arg1: i32) -> (i32, i32, i32, i32) {
    %c0_i32 = arith.constant 0 : i32
    %c0_i32_0 = arith.constant 0 : i32
    %c0_i32_1 = arith.constant 0 : i32
    return %arg0, %arg1, %c0_i32, %c0_i32_0 : i32, i32, i32, i32
  }
}

</mosaic_0001>

<llo_original>
// kernel: tpu_custom_call.1
$region0: #{tpu_custom_call.1}
  #allocation0 [shape = 'u32[]', space=smem, size = 0x4, offset = 0x4, fixed_abs, tag = 'smem constant byte address 0x4 - core index']
  #allocation1 [shape = 'u32[72,128]{1,0:T(1,128)}', space=vmem, size = 0x9000, scoped, tag = 'internal scratch']
  #allocation2 [shape = 'f32[64,4]{1,0:T(8,128)}', space=vmem, size = 0x8000, scoped, tag = 'scratch operand']
  %s0 = inlined_call_operand.hbm [shape: f32[2,8,8,16], index: 0, kind: input, shape index: {}]
  %s1 = inlined_call_operand.vmem [shape: f32[16,4], index: 1, kind: input, shape index: {}]
  %s2 = inlined_call_operand.vmem [shape: f32[1,4], index: 2, kind: input, shape index: {}]
  %s3 = inlined_call_operand.vmem [shape: f32[1,4], index: 3, kind: input, shape index: {}]
  %s4 = inlined_call_operand.vmem [shape: f32[3,12,4], index: 4, kind: input, shape index: {}]
  %s5 = inlined_call_operand.vmem [shape: f32[1,4], index: 5, kind: input, shape index: {}]
  %s6 = inlined_call_operand.vmem [shape: f32[1,4], index: 6, kind: input, shape index: {}]
  %s7 = inlined_call_operand.vmem [shape: f32[4,16], index: 7, kind: input, shape index: {}]
  %s8 = inlined_call_operand.vmem [shape: f32[1,16], index: 8, kind: input, shape index: {}]
  %s9 = inlined_call_operand.vmem [shape: f32[1,16], index: 9, kind: input, shape index: {}]
  %s10 = inlined_call_operand.hbm [shape: f32[2,8,8,16], index: 10, kind: output, shape index: {}]
  %s11 = sld [smem:[#allocation0]]
  $region93: #{tpu_custom_call.1} parent=0
    _
  %s13 = ssub.s32 1, %s11
  %s14 = scalar_select 0, %s13, %s11
  $region1: #{tpu_custom_call.1} parent=0
    #allocation3 [shape = 'u8[65536]{0}', space=vmem, size = 0x10000, scoped, tag = 'input window, operand 0']
    #allocation4 [shape = 's32[2]{0}', space=sflag, size = 0x8, scoped, tag = 'scoped memory for tpu_custom_call.1']
    #allocation5 [shape = 's32[2]{0}', space=sflag, size = 0x8, scoped, tag = 'scoped memory for tpu_custom_call.1']
    #allocation6 [shape = 'u8[32768]{0}', space=vmem, size = 0x8000, scoped, tag = 'output window, operand 0']
    %15 = vsyncpa [#allocation4], 0
    %s16 = scalar_lea.sflag [#allocation4], 1
    %17 = vsyncpa %s16, 0
    %18 = vsyncpa [#allocation5], 0
    %s19 = scalar_lea.sflag [#allocation5], 1
    %20 = vsyncpa %s19, 0
    loop: start=0, step=1, limit=6
    $region2: #{tpu_custom_call.1} parent=1 // loop_pre_header
      _
    $region3: #{tpu_custom_call.1} parent=1 // loop_header
      %s22 = sphi 0, %s26
      %p23 = scmp.ge.s32.totalorder %s22, 6
      %s29 = sphi 0, %s41
      %s30 = sphi 0, %s37
      %s31 = sphi 0, %s29
      %s32 = sphi 0, %s30
      %s33 = sphi 0, %s31
      %s34 = sphi 0, %s32
      %s44 = sphi 0, %s46
      %s47 = sphi 0, %s44
      %s48 = sphi 0, %s47
      %s64 = sphi 0, %s48
      %s68 = sphi 0, %s68
      %s70 = sphi 0, %s68
      %s71 = sphi 0, %s70
      %s85 = sphi 0, %s71
      %s89 = sphi 0, %s89
      %s91 = sphi 0, %s89
      %s92 = sphi 0, %s91
      %s106 = sphi 0, %s92
      %s110 = sphi 0, %s110
      %s112 = sphi 0, %s110
      %s113 = sphi 0, %s112
      %s127 = sphi 0, %s113
      %s131 = sphi 0, %s131
      %s133 = sphi 0, %s131
      %s134 = sphi 0, %s133
      %s148 = sphi 0, %s134
      %s152 = sphi 0, %s152
      %s154 = sphi 0, %s152
      %s155 = sphi 0, %s154
      %s169 = sphi 0, %s155
      %s173 = sphi 0, %s173
      %s175 = sphi 0, %s173
      %s176 = sphi 0, %s175
      %s190 = sphi 0, %s176
      %s194 = sphi 0, %s194
      %s196 = sphi 0, %s194
      %s197 = sphi 0, %s196
      %s211 = sphi 0, %s197
      %s215 = sphi 0, %s215
      %s217 = sphi 0, %s215
      %s218 = sphi 0, %s217
      %s232 = sphi 0, %s218
      %s236 = sphi 0, %s236
      %s238 = sphi 0, %s236
      %s239 = sphi 0, %s238
      %s253 = sphi 0, %s239
      %s261 = sphi 0, %s263
      %s264 = sphi 0, %s261
      %s265 = sphi 0, %s264
      %s281 = sphi 0, %s265
    $region4: #{tpu_custom_call.1} parent=1 // loop_header_branch
      %25 = sbr.rel (%p23) target = $region8
    $region5: #{tpu_custom_call.1} parent=1 // loop_body
      %s27 = ssub.s32 %s22, 1
      %s28 = ssub.s32 %s22, 2
      %s35 = sadd.s32 1, %s30
      %p36 = scmp.ge.s32.totalorder %s35, 2
      %s37 = scalar_select %p36, 0, %s35
      %s38 = sadd.s32 1, %s29
      %s39 = scalar_select %p36, %s38, %s29
      %p40 = scmp.ge.s32.totalorder %s39, 2
      %s41 = scalar_select %p40, 0, %s39
      %s42 = ssub.s32 %s29, %s41
      %p43 = scmp.eq.s32.totalorder %s42, 0
      %s45 = sadd.s32 %s44, 1
      %s46 = scalar_select %p43, %s44, %s45
      %p49 = pneg %p43
      %p50 = scmp.eq.s32.totalorder %s22, 3
      %p51 = por %p49, %p50
      %p52 = scmp.ne.s32.totalorder %s44, %s47
      %p53 = scmp.eq.s32.totalorder %s22, 0
      %p54 = por %p52, %p53
      %p55 = scmp.ne.s32.totalorder %s44, %s47
      %p56 = scmp.eq.s32.totalorder %s27, 3
      %p57 = por %p55, %p56
      %p58 = scmp.ne.s32.totalorder %s47, %s48
      %p59 = scmp.eq.s32.totalorder %s27, 0
      %p60 = por %p58, %p59
      %p61 = scmp.ne.s32.totalorder %s47, %s48
      %p62 = scmp.eq.s32.totalorder %s28, 3
      %p63 = por %p61, %p62
      %p65 = scmp.ne.s32.totalorder %s48, %s64
      %p66 = scmp.eq.s32.totalorder %s28, 0
      %p67 = por %p65, %p66
      %s69 = sadd.s32 %s68, 1
      %p72 = scmp.eq.s32.totalorder %s22, 3
      %p73 = scmp.ne.s32.totalorder %s68, %s70
      %p74 = scmp.eq.s32.totalorder %s22, 0
      %p75 = por %p73, %p74
      %p76 = scmp.ne.s32.totalorder %s68, %s70
      %p77 = scmp.eq.s32.totalorder %s27, 3
      %p78 = por %p76, %p77
      %p79 = scmp.ne.s32.totalorder %s70, %s71
      %p80 = scmp.eq.s32.totalorder %s27, 0
      %p81 = por %p79, %p80
      %p82 = scmp.ne.s32.totalorder %s70, %s71
      %p83 = scmp.eq.s32.totalorder %s28, 3
      %p84 = por %p82, %p83
      %p86 = scmp.ne.s32.totalorder %s71, %s85
      %p87 = scmp.eq.s32.totalorder %s28, 0
      %p88 = por %p86, %p87
      %s90 = sadd.s32 %s89, 1
      %p93 = scmp.eq.s32.totalorder %s22, 3
      %p94 = scmp.ne.s32.totalorder %s89, %s91
      %p95 = scmp.eq.s32.totalorder %s22, 0
      %p96 = por %p94, %p95
      %p97 = scmp.ne.s32.totalorder %s89, %s91
      %p98 = scmp.eq.s32.totalorder %s27, 3
      %p99 = por %p97, %p98
      %p100 = scmp.ne.s32.totalorder %s91, %s92
      %p101 = scmp.eq.s32.totalorder %s27, 0
      %p102 = por %p100, %p101
      %p103 = scmp.ne.s32.totalorder %s91, %s92
      %p104 = scmp.eq.s32.totalorder %s28, 3
      %p105 = por %p103, %p104
      %p107 = scmp.ne.s32.totalorder %s92, %s106
      %p108 = scmp.eq.s32.totalorder %s28, 0
      %p109 = por %p107, %p108
      %s111 = sadd.s32 %s110, 1
      %p114 = scmp.eq.s32.totalorder %s22, 3
      %p115 = scmp.ne.s32.totalorder %s110, %s112
      %p116 = scmp.eq.s32.totalorder %s22, 0
      %p117 = por %p115, %p116
      %p118 = scmp.ne.s32.totalorder %s110, %s112
      %p119 = scmp.eq.s32.totalorder %s27, 3
      %p120 = por %p118, %p119
      %p121 = scmp.ne.s32.totalorder %s112, %s113
      %p122 = scmp.eq.s32.totalorder %s27, 0
      %p123 = por %p121, %p122
      %p124 = scmp.ne.s32.totalorder %s112, %s113
      %p125 = scmp.eq.s32.totalorder %s28, 3
      %p126 = por %p124, %p125
      %p128 = scmp.ne.s32.totalorder %s113, %s127
      %p129 = scmp.eq.s32.totalorder %s28, 0
      %p130 = por %p128, %p129
      %s132 = sadd.s32 %s131, 1
      %p135 = scmp.eq.s32.totalorder %s22, 3
      %p136 = scmp.ne.s32.totalorder %s131, %s133
      %p137 = scmp.eq.s32.totalorder %s22, 0
      %p138 = por %p136, %p137
      %p139 = scmp.ne.s32.totalorder %s131, %s133
      %p140 = scmp.eq.s32.totalorder %s27, 3
      %p141 = por %p139, %p140
      %p142 = scmp.ne.s32.totalorder %s133, %s134
      %p143 = scmp.eq.s32.totalorder %s27, 0
      %p144 = por %p142, %p143
      %p145 = scmp.ne.s32.totalorder %s133, %s134
      %p146 = scmp.eq.s32.totalorder %s28, 3
      %p147 = por %p145, %p146
      %p149 = scmp.ne.s32.totalorder %s134, %s148
      %p150 = scmp.eq.s32.totalorder %s28, 0
      %p151 = por %p149, %p150
      %s153 = sadd.s32 %s152, 1
      %p156 = scmp.eq.s32.totalorder %s22, 3
      %p157 = scmp.ne.s32.totalorder %s152, %s154
      %p158 = scmp.eq.s32.totalorder %s22, 0
      %p159 = por %p157, %p158
      %p160 = scmp.ne.s32.totalorder %s152, %s154
      %p161 = scmp.eq.s32.totalorder %s27, 3
      %p162 = por %p160, %p161
      %p163 = scmp.ne.s32.totalorder %s154, %s155
      %p164 = scmp.eq.s32.totalorder %s27, 0
      %p165 = por %p163, %p164
      %p166 = scmp.ne.s32.totalorder %s154, %s155
      %p167 = scmp.eq.s32.totalorder %s28, 3
      %p168 = por %p166, %p167
      %p170 = scmp.ne.s32.totalorder %s155, %s169
      %p171 = scmp.eq.s32.totalorder %s28, 0
      %p172 = por %p170, %p171
      %s174 = sadd.s32 %s173, 1
      %p177 = scmp.eq.s32.totalorder %s22, 3
      %p178 = scmp.ne.s32.totalorder %s173, %s175
      %p179 = scmp.eq.s32.totalorder %s22, 0
      %p180 = por %p178, %p179
      %p181 = scmp.ne.s32.totalorder %s173, %s175
      %p182 = scmp.eq.s32.totalorder %s27, 3
      %p183 = por %p181, %p182
      %p184 = scmp.ne.s32.totalorder %s175, %s176
      %p185 = scmp.eq.s32.totalorder %s27, 0
      %p186 = por %p184, %p185
      %p187 = scmp.ne.s32.totalorder %s175, %s176
      %p188 = scmp.eq.s32.totalorder %s28, 3
      %p189 = por %p187, %p188
      %p191 = scmp.ne.s32.totalorder %s176, %s190
      %p192 = scmp.eq.s32.totalorder %s28, 0
      %p193 = por %p191, %p192
      %s195 = sadd.s32 %s194, 1
      %p198 = scmp.eq.s32.totalorder %s22, 3
      %p199 = scmp.ne.s32.totalorder %s194, %s196
      %p200 = scmp.eq.s32.totalorder %s22, 0
      %p201 = por %p199, %p200
      %p202 = scmp.ne.s32.totalorder %s194, %s196
      %p203 = scmp.eq.s32.totalorder %s27, 3
      %p204 = por %p202, %p203
      %p205 = scmp.ne.s32.totalorder %s196, %s197
      %p206 = scmp.eq.s32.totalorder %s27, 0
      %p207 = por %p205, %p206
      %p208 = scmp.ne.s32.totalorder %s196, %s197
      %p209 = scmp.eq.s32.totalorder %s28, 3
      %p210 = por %p208, %p209
      %p212 = scmp.ne.s32.totalorder %s197, %s211
      %p213 = scmp.eq.s32.totalorder %s28, 0
      %p214 = por %p212, %p213
      %s216 = sadd.s32 %s215, 1
      %p219 = scmp.eq.s32.totalorder %s22, 3
      %p220 = scmp.ne.s32.totalorder %s215, %s217
      %p221 = scmp.eq.s32.totalorder %s22, 0
      %p222 = por %p220, %p221
      %p223 = scmp.ne.s32.totalorder %s215, %s217
      %p224 = scmp.eq.s32.totalorder %s27, 3
      %p225 = por %p223, %p224
      %p226 = scmp.ne.s32.totalorder %s217, %s218
      %p227 = scmp.eq.s32.totalorder %s27, 0
      %p228 = por %p226, %p227
      %p229 = scmp.ne.s32.totalorder %s217, %s218
      %p230 = scmp.eq.s32.totalorder %s28, 3
      %p231 = por %p229, %p230
      %p233 = scmp.ne.s32.totalorder %s218, %s232
      %p234 = scmp.eq.s32.totalorder %s28, 0
      %p235 = por %p233, %p234
      %s237 = sadd.s32 %s236, 1
      %p240 = scmp.eq.s32.totalorder %s22, 3
      %p241 = scmp.ne.s32.totalorder %s236, %s238
      %p242 = scmp.eq.s32.totalorder %s22, 0
      %p243 = por %p241, %p242
      %p244 = scmp.ne.s32.totalorder %s236, %s238
      %p245 = scmp.eq.s32.totalorder %s27, 3
      %p246 = por %p244, %p245
      %p247 = scmp.ne.s32.totalorder %s238, %s239
      %p248 = scmp.eq.s32.totalorder %s27, 0
      %p249 = por %p247, %p248
      %p250 = scmp.ne.s32.totalorder %s238, %s239
      %p251 = scmp.eq.s32.totalorder %s28, 3
      %p252 = por %p250, %p251
      %p254 = scmp.ne.s32.totalorder %s239, %s253
      %p255 = scmp.eq.s32.totalorder %s28, 0
      %p256 = por %p254, %p255
      %s257 = ssub.s32 %s29, %s41
      %s258 = ssub.s32 %s30, %s37
      %s259 = sor.u32 %s257, %s258
      %p260 = scmp.eq.s32.totalorder %s259, 0
      %s262 = sadd.s32 %s261, 1
      %s263 = scalar_select %p260, %s261, %s262
      %p266 = pneg %p260
      %p267 = scmp.eq.s32.totalorder %s22, 3
      %p268 = por %p266, %p267
      %p269 = scmp.ne.s32.totalorder %s261, %s264
      %p270 = scmp.eq.s32.totalorder %s22, 0
      %p271 = por %p269, %p270
      %p272 = scmp.ne.s32.totalorder %s261, %s264
      %p273 = scmp.eq.s32.totalorder %s27, 3
      %p274 = por %p272, %p273
      %p275 = scmp.ne.s32.totalorder %s264, %s265
      %p276 = scmp.eq.s32.totalorder %s27, 0
      %p277 = por %p275, %p276
      %p278 = scmp.ne.s32.totalorder %s264, %s265
      %p279 = scmp.eq.s32.totalorder %s28, 3
      %p280 = por %p278, %p279
      %p282 = scmp.ne.s32.totalorder %s265, %s281
      %p283 = scmp.eq.s32.totalorder %s28, 0
      %p284 = por %p282, %p283
      %p285 = scmp.le.s32.totalorder 1, %s22
      %p286 = scmp.lt.s32.totalorder %s22, 5
      %p287 = pnand %p285, %p286
      %p288 = pneg %p287
      // Predicated region
      $region9: #{tpu_custom_call.1} parent=5 // pred_check
        _
      $region10: #{tpu_custom_call.1} parent=5 // pred_check_branch
        %290 = sbr.rel (%p287) target = $region12
      $region11: #{tpu_custom_call.1} parent=5 // pred_region
        %s291 = ssub.s32 %s22, 1
        // Predicated region
        $region13: #{tpu_custom_call.1} parent=11 // pred_check
          %p292 = pneg %p81
        $region14: #{tpu_custom_call.1} parent=11 // pred_check_branch
          %294 = sbr.rel (%p292) target = $region16
        $region15: #{tpu_custom_call.1} parent=11 // pred_region
          _
        $region16: #{tpu_custom_call.1} parent=11 // pred_fallthru
          _
        // Predicated region
        $region17: #{tpu_custom_call.1} parent=11 // pred_check
          %p295 = pneg %p102
        $region18: #{tpu_custom_call.1} parent=11 // pred_check_branch
          %297 = sbr.rel (%p295) target = $region20
        $region19: #{tpu_custom_call.1} parent=11 // pred_region
          _
        $region20: #{tpu_custom_call.1} parent=11 // pred_fallthru
          _
        // Predicated region
        $region21: #{tpu_custom_call.1} parent=11 // pred_check
          %p298 = pneg %p123
        $region22: #{tpu_custom_call.1} parent=11 // pred_check_branch
          %300 = sbr.rel (%p298) target = $region24
        $region23: #{tpu_custom_call.1} parent=11 // pred_region
          _
        $region24: #{tpu_custom_call.1} parent=11 // pred_fallthru
          _
        // Predicated region
        $region25: #{tpu_custom_call.1} parent=11 // pred_check
          %p301 = pneg %p144
        $region26: #{tpu_custom_call.1} parent=11 // pred_check_branch
          %303 = sbr.rel (%p301) target = $region28
        $region27: #{tpu_custom_call.1} parent=11 // pred_region
          _
        $region28: #{tpu_custom_call.1} parent=11 // pred_fallthru
          _
        // Predicated region
        $region29: #{tpu_custom_call.1} parent=11 // pred_check
          %p304 = pneg %p165
        $region30: #{tpu_custom_call.1} parent=11 // pred_check_branch
          %306 = sbr.rel (%p304) target = $region32
        $region31: #{tpu_custom_call.1} parent=11 // pred_region
          _
        $region32: #{tpu_custom_call.1} parent=11 // pred_fallthru
          _
        // Predicated region
        $region33: #{tpu_custom_call.1} parent=11 // pred_check
          %p307 = pneg %p186
        $region34: #{tpu_custom_call.1} parent=11 // pred_check_branch
          %309 = sbr.rel (%p307) target = $region36
        $region35: #{tpu_custom_call.1} parent=11 // pred_region
          _
        $region36: #{tpu_custom_call.1} parent=11 // pred_fallthru
          _
        // Predicated region
        $region37: #{tpu_custom_call.1} parent=11 // pred_check
          %p310 = pneg %p207
        $region38: #{tpu_custom_call.1} parent=11 // pred_check_branch
          %312 = sbr.rel (%p310) target = $region40
        $region39: #{tpu_custom_call.1} parent=11 // pred_region
          _
        $region40: #{tpu_custom_call.1} parent=11 // pred_fallthru
          _
        // Predicated region
        $region41: #{tpu_custom_call.1} parent=11 // pred_check
          %p313 = pneg %p228
        $region42: #{tpu_custom_call.1} parent=11 // pred_check_branch
          %315 = sbr.rel (%p313) target = $region44
        $region43: #{tpu_custom_call.1} parent=11 // pred_region
          _
        $region44: #{tpu_custom_call.1} parent=11 // pred_fallthru
          _
        // Predicated region
        $region45: #{tpu_custom_call.1} parent=11 // pred_check
          %p316 = pneg %p249
        $region46: #{tpu_custom_call.1} parent=11 // pred_check_branch
          %318 = sbr.rel (%p316) target = $region48
        $region47: #{tpu_custom_call.1} parent=11 // pred_region
          _
        $region48: #{tpu_custom_call.1} parent=11 // pred_fallthru
          _
      $region12: #{tpu_custom_call.1} parent=5 // pred_fallthru
        _
      %p319 = scmp.lt.s32.totalorder %s22, 4
      // Predicated region
      $region49: #{tpu_custom_call.1} parent=5 // pred_check
        %p320 = pneg %p319
      $region50: #{tpu_custom_call.1} parent=5 // pred_check_branch
        %322 = sbr.rel (%p320) target = $region52
      $region51: #{tpu_custom_call.1} parent=5 // pred_region
        // Predicated region
        $region53: #{tpu_custom_call.1} parent=51 // pred_check
          %p323 = pneg %p54
        $region54: #{tpu_custom_call.1} parent=51 // pred_check_branch
          %325 = sbr.rel (%p323) target = $region56
        $region55: #{tpu_custom_call.1} parent=51 // pred_region
          %s326 = sand.u32 %s44, 1
          %s327 = scalar_lea.sflag [#allocation4], %s326
          %s328 = sand.u32 %s44, 1
          %s329 = smul.addr %s328, 64
          %s330 = scalar_lea.vmem [#allocation3], %s329
          %332 = vsyncadd %s327, 0
          %s333 = smul.addr %s29, 8
          %s334 = smul.addr %s333, 8
          %s335 = scalar_lea.hbm %s0, %s334
          %s336 = sshll.u32 %s335, 4
          %s337 = int_to_ptr.hbm [resolvable:$true] %s336
          %s338 = sshll.u32 %s330, 4
          %s339 = int_to_ptr.vmem [resolvable:$true] %s338
          %344 = dma.hbm_to_vmem [thread:$0]  %s337, 1024, %s339, %s327, 128, 128, 8
        $region56: #{tpu_custom_call.1} parent=51 // pred_fallthru
          _
      $region52: #{tpu_custom_call.1} parent=5 // pred_fallthru
        _
      %p345 = scmp.le.s32.totalorder 1, %s22
      %p346 = scmp.lt.s32.totalorder %s22, 5
      %p347 = pnand %p345, %p346
      %p348 = pneg %p347
      // Predicated region
      $region57: #{tpu_custom_call.1} parent=5 // pred_check
        _
      $region58: #{tpu_custom_call.1} parent=5 // pred_check_branch
        %350 = sbr.rel (%p347) target = $region60
      $region59: #{tpu_custom_call.1} parent=5 // pred_region
        %s351 = ssub.s32 %s22, 1
        %s352 = sand.u32 %s47, 1
        %s353 = scalar_lea.sflag [#allocation4], %s352
        %s354 = sand.u32 %s47, 1
        %s355 = smul.addr %s354, 64
        %s356 = scalar_lea.vmem [#allocation3], %s355
        // Predicated region
        $region61: #{tpu_custom_call.1} parent=59 // pred_check
          %p357 = pneg %p60
        $region62: #{tpu_custom_call.1} parent=59 // pred_check_branch
          %359 = sbr.rel (%p357) target = $region64
        $region63: #{tpu_custom_call.1} parent=59 // pred_region
          %361 = dma.done %s353, 1024
        $region64: #{tpu_custom_call.1} parent=59 // pred_fallthru
          _
        %s362 = sand.u32 %s47, 1
        %s363 = scalar_lea.sflag [#allocation4], %s362
        %s364 = sand.u32 %s47, 1
        %s365 = smul.addr %s364, 64
        %s366 = scalar_lea.vmem [#allocation3], %s365
        %p367 = pneg %p60
        %p368 = pneg %p57
        %p369 = pneg %p81
        %p370 = pneg %p78
        %p371 = pneg %p102
        %p372 = pneg %p99
        %p373 = pneg %p123
        %p374 = pneg %p120
        %p375 = pneg %p144
        %p376 = pneg %p141
        %p377 = pneg %p165
        %p378 = pneg %p162
        %p379 = pneg %p186
        %p380 = pneg %p183
        %p381 = pneg %p207
        %p382 = pneg %p204
        %p383 = pneg %p228
        %p384 = pneg %p225
        %p385 = pneg %p249
        %p386 = pneg %p246
        %p387 = pneg %p277
        %p388 = pneg %p274
        %s389 = sand.u32 %s264, 1
        %s390 = scalar_lea.sflag [#allocation5], %s389
        %s391 = sand.u32 %s264, 1
        %s392 = smul.addr %s391, 32
        %s393 = scalar_lea.vmem [#allocation6], %s392
        %s394 = smul.u32 4, %s32
        %s395 = smul.u32 %s32, 4
        %vm396 = vcmask 31744
        %397 = vst.msk [vmem:[#allocation2] sm:$0xff] %vm396, 0.0
        %398 = vst.msk [vmem:[#allocation2 + $0x38] sm:$0xff] %vm396, 0.0
        %s399 = smul.u32 %s395, 8
        %s400 = scalar_lea.vmem %s356, %s399 [#allocation3]
        %v401 = vld [vmem:[%s400] sm:$0xff]
        %v402 = vld [vmem:[%s400 + $0x8] sm:$0xff]
        %v403 = vld [vmem:[%s400 + $0x10] sm:$0xff]
        %v404 = vld [vmem:[%s400 + $0x18] sm:$0xff]
        %v405 = vld [vmem:[%s1] sm:$0xff]
        %v406 = vld [vmem:[%s1 + $0x8] sm:$0xff]
        %vm407 = vcmask 130048
        %v409 = vsel %vm407, %v401, 0
        %v412 = vsel %vm407, %v402, 0
        %v415 = vsel %vm407, %v403, 0
        %v418 = vsel %vm407, %v404, 0
        %420 = vmatpush.msra.mxu0 0.0
        %421 = vmatpush.msra.mxu0 0.0
        %422 = vmatpush.msra.mxu0 0.0
        %423 = vmatpush.msra.mxu0 0.0
        %424 = vmatpush.msra.mxu0 0.0
        %425 = vmatpush.msra.mxu0 0.0
        %426 = vmatpush.msra.mxu0 0.0
        %427 = vmatpush.msra.mxu0 0.0
        %428 = vmatpush.msra.mxu0 0.0
        %429 = vmatpush.msra.mxu0 0.0
        %430 = vmatpush.msra.mxu0 0.0
        %431 = vmatpush.msra.mxu0 0.0
        %432 = vmatpush.msra.mxu0 0.0
        %433 = vmatpush.msra.mxu0 0.0
        %434 = vmatpush.msra.mxu0 %v406
        %435 = vmatpush.msra.mxu0 %v405
        %436 = vmatmul.f32.gmra.mxu0 %v409
        %v437 = vpop.f32.mrf.mxu0
        %v438 = vadd.f32 0.0, %v437
        %439 = vmatmul.f32.gmra.mxu0 %v412
        %v440 = vpop.f32.mrf.mxu0
        %v441 = vadd.f32 0.0, %v440
        %442 = vmatmul.f32.gmra.mxu0 %v415
        %v443 = vpop.f32.mrf.mxu0
        %v444 = vadd.f32 0.0, %v443
        %445 = vmatmul.f32.gmra.mxu0 %v418
        %v446 = vpop.f32.mrf.mxu0
        %v447 = vadd.f32 0.0, %v446
        %448 = vdwg.mxu0
        %v449 = vld [vmem:[%s2] sm:$0x1]
        %v451 = vperm.slane %v449, 0
        %v453 = vmul.f32 %v438, %v451
        %v454 = vmul.f32 %v441, %v451
        %v455 = vmul.f32 %v444, %v451
        %v456 = vmul.f32 %v447, %v451
        %v457 = vld [vmem:[%s3] sm:$0x1]
        %v459 = vperm.slane %v457, 0
        %v461 = vadd.f32 %v453, %v459
        %v462 = vadd.f32 %v454, %v459
        %v463 = vadd.f32 %v455, %v459
        %v464 = vadd.f32 %v456, %v459
        %v465 = vmax.f32 %v461, 0.0
        %v466 = vmax.f32 %v462, 0.0
        %v467 = vmax.f32 %v463, 0.0
        %v468 = vmax.f32 %v464, 0.0
        %469 = vst.msk [vmem:[#allocation2 + $0x10] sm:$0xff] %vm396, %v465
        %470 = vst.msk [vmem:[#allocation2 + $0x18] sm:$0xff] %vm396, %v466
        %471 = vst.msk [vmem:[#allocation2 + $0x20] sm:$0xff] %vm396, %v467
        %472 = vst.msk [vmem:[#allocation2 + $0x28] sm:$0xff] %vm396, %v468
        %p473 = scmp.gt.s32.totalorder %s32, 0
        // Predicated region
        $region65: #{tpu_custom_call.1} parent=59 // pred_check
          %p474 = pneg %p473
        $region66: #{tpu_custom_call.1} parent=59 // pred_check_branch
          %476 = sbr.rel (%p474) target = $region68
        $region67: #{tpu_custom_call.1} parent=59 // pred_region
          %s477 = ssub.s32 %s395, 1
          %s478 = smul.u32 %s477, 8
          %s479 = scalar_lea.vmem %s356, %s478 [#allocation3]
          %v480 = vld [vmem:[%s479] sm:$0xff]
          %v481 = vld [vmem:[%s1] sm:$0xff]
          %v482 = vld [vmem:[%s1 + $0x8] sm:$0xff]
          %v484 = vsel %vm407, %v480, 0
          %486 = vmatpush.msra.mxu0 0.0
          %487 = vmatpush.msra.mxu0 0.0
          %488 = vmatpush.msra.mxu0 0.0
          %489 = vmatpush.msra.mxu0 0.0
          %490 = vmatpush.msra.mxu0 0.0
          %491 = vmatpush.msra.mxu0 0.0
          %492 = vmatpush.msra.mxu0 0.0
          %493 = vmatpush.msra.mxu0 0.0
          %494 = vmatpush.msra.mxu0 0.0
          %495 = vmatpush.msra.mxu0 0.0
          %496 = vmatpush.msra.mxu0 0.0
          %497 = vmatpush.msra.mxu0 0.0
          %498 = vmatpush.msra.mxu0 0.0
          %499 = vmatpush.msra.mxu0 0.0
          %500 = vmatpush.msra.mxu0 %v482
          %501 = vmatpush.msra.mxu0 %v481
          %502 = vmatmul.f32.gmra.mxu0 %v484
          %v503 = vpop.f32.mrf.mxu0
          %v504 = vadd.f32 0.0, %v503
          %505 = vdwg.mxu0
          %v506 = vld [vmem:[%s2] sm:$0x1]
          %v508 = vperm.slane %v506, 0
          %v510 = vmul.f32 %v504, %v508
          %v511 = vld [vmem:[%s3] sm:$0x1]
          %v513 = vperm.slane %v511, 0
          %v515 = vadd.f32 %v510, %v513
          %v516 = vmax.f32 %v515, 0.0
          %517 = vst.msk [vmem:[#allocation2 + $0x8] sm:$0xff] %vm396, %v516
        $region68: #{tpu_custom_call.1} parent=59 // pred_fallthru
          _
        %p518 = scmp.eq.s32.totalorder %s32, 0
        // Predicated region
        $region69: #{tpu_custom_call.1} parent=59 // pred_check
          %p519 = pneg %p518
        $region70: #{tpu_custom_call.1} parent=59 // pred_check_branch
          %521 = sbr.rel (%p519) target = $region72
        $region71: #{tpu_custom_call.1} parent=59 // pred_region
          %522 = vst.msk [vmem:[#allocation2 + $0x8] sm:$0xff] %vm396, 0.0
        $region72: #{tpu_custom_call.1} parent=59 // pred_fallthru
          _
        %p523 = scmp.lt.s32.totalorder %s32, 1
        // Predicated region
        $region73: #{tpu_custom_call.1} parent=59 // pred_check
          %p524 = pneg %p523
        $region74: #{tpu_custom_call.1} parent=59 // pred_check_branch
          %526 = sbr.rel (%p524) target = $region76
        $region75: #{tpu_custom_call.1} parent=59 // pred_region
          %s527 = sadd.s32 %s395, 4
          %s528 = smul.u32 %s527, 8
          %s529 = scalar_lea.vmem %s356, %s528 [#allocation3]
          %v530 = vld [vmem:[%s529] sm:$0xff]
          %v531 = vld [vmem:[%s1] sm:$0xff]
          %v532 = vld [vmem:[%s1 + $0x8] sm:$0xff]
          %v534 = vsel %vm407, %v530, 0
          %536 = vmatpush.msra.mxu0 0.0
          %537 = vmatpush.msra.mxu0 0.0
          %538 = vmatpush.msra.mxu0 0.0
          %539 = vmatpush.msra.mxu0 0.0
          %540 = vmatpush.msra.mxu0 0.0
          %541 = vmatpush.msra.mxu0 0.0
          %542 = vmatpush.msra.mxu0 0.0
          %543 = vmatpush.msra.mxu0 0.0
          %544 = vmatpush.msra.mxu0 0.0
          %545 = vmatpush.msra.mxu0 0.0
          %546 = vmatpush.msra.mxu0 0.0
          %547 = vmatpush.msra.mxu0 0.0
          %548 = vmatpush.msra.mxu0 0.0
          %549 = vmatpush.msra.mxu0 0.0
          %550 = vmatpush.msra.mxu0 %v532
          %551 = vmatpush.msra.mxu0 %v531
          %552 = vmatmul.f32.gmra.mxu0 %v534
          %v553 = vpop.f32.mrf.mxu0
          %v554 = vadd.f32 0.0, %v553
          %555 = vdwg.mxu0
          %v556 = vld [vmem:[%s2] sm:$0x1]
          %v558 = vperm.slane %v556, 0
          %v560 = vmul.f32 %v554, %v558
          %v561 = vld [vmem:[%s3] sm:$0x1]
          %v563 = vperm.slane %v561, 0
          %v565 = vadd.f32 %v560, %v563
          %v566 = vmax.f32 %v565, 0.0
          %567 = vst.msk [vmem:[#allocation2 + $0x30] sm:$0xff] %vm396, %v566
        $region76: #{tpu_custom_call.1} parent=59 // pred_fallthru
          _
        %p568 = scmp.eq.s32.totalorder %s32, 1
        // Predicated region
        $region77: #{tpu_custom_call.1} parent=59 // pred_check
          %p569 = pneg %p568
        $region78: #{tpu_custom_call.1} parent=59 // pred_check_branch
          %571 = sbr.rel (%p569) target = $region80
        $region79: #{tpu_custom_call.1} parent=59 // pred_region
          %572 = vst.msk [vmem:[#allocation2 + $0x30] sm:$0xff] %vm396, 0.0
        $region80: #{tpu_custom_call.1} parent=59 // pred_fallthru
          _
        %v573 = vlaneseq
        %v574 = vshrl.u32 %v573, 7
        %v575 = vadd.s32 %v574, 8
        %v576 = vadd.s32 %v574, 16
        %v577 = vadd.s32 %v574, 24
        %vm578 = vcmp.lt.s32.totalorder %v574, 0
        %v579 = vsub.s32 0, %v574
        %v580 = vsel %vm578, %v579, %v574
        %v581 = vshrl.u32 %v580, 3
        %v582 = vand.u32 %v580, 7
        %v583 = vsub.s32 0, %v582
        %v584 = vsel %vm578, %v583, %v582
        %vm585 = vcmp.lt.s32.totalorder %v575, 0
        %v586 = vsub.s32 0, %v575
        %v587 = vsel %vm585, %v586, %v575
        %v588 = vshrl.u32 %v587, 3
        %v589 = vand.u32 %v587, 7
        %v590 = vsub.s32 0, %v589
        %v591 = vsel %vm585, %v590, %v589
        %vm592 = vcmp.lt.s32.totalorder %v576, 0
        %v593 = vsub.s32 0, %v576
        %v594 = vsel %vm592, %v593, %v576
        %v595 = vshrl.u32 %v594, 3
        %v596 = vand.u32 %v594, 7
        %v597 = vsub.s32 0, %v596
        %v598 = vsel %vm592, %v597, %v596
        %vm599 = vcmp.lt.s32.totalorder %v577, 0
        %v600 = vsub.s32 0, %v577
        %v601 = vsel %vm599, %v600, %v577
        %v602 = vshrl.u32 %v601, 3
        %v603 = vand.u32 %v601, 7
        %v604 = vsub.s32 0, %v603
        %v605 = vsel %vm599, %v604, %v603
        %vm606 = vcmp.ne.s32.totalorder %v584, 0
        %vm607 = vcmp.ne.s32.totalorder %v591, 0
        %vm608 = vcmp.ne.s32.totalorder %v598, 0
        %vm609 = vcmp.ne.s32.totalorder %v605, 0
        %vm610 = vcmp.lt.s32.totalorder %v584, 0
        %vm611 = vcmp.lt.s32.totalorder %v591, 0
        %vm612 = vcmp.lt.s32.totalorder %v598, 0
        %vm613 = vcmp.lt.s32.totalorder %v605, 0
        %vm614 = vmand %vm610, %vm606
        %vm615 = vmand %vm611, %vm607
        %vm616 = vmand %vm612, %vm608
        %vm617 = vmand %vm613, %vm609
        %v618 = vadd.s32 %v584, 8
        %v619 = vadd.s32 %v591, 8
        %v620 = vadd.s32 %v598, 8
        %v621 = vadd.s32 %v605, 8
        %v622 = vsel %vm614, %v618, %v584
        %v623 = vsel %vm615, %v619, %v591
        %v624 = vsel %vm616, %v620, %v598
        %v625 = vsel %vm617, %v621, %v605
        %vm626 = vcmp.gt.s32.totalorder %v622, 0
        %vm627 = vcmp.gt.s32.totalorder %v623, 0
        %vm628 = vcmp.gt.s32.totalorder %v624, 0
        %vm629 = vcmp.gt.s32.totalorder %v625, 0
        %vm630 = vcmp.lt.s32.totalorder %v622, 7
        %vm631 = vcmp.lt.s32.totalorder %v623, 7
        %vm632 = vcmp.lt.s32.totalorder %v624, 7
        %vm633 = vcmp.lt.s32.totalorder %v625, 7
        %v634 = vld [vmem:[#allocation2 + $0x7] sm:$0xff]
        %v635 = vld [vmem:[#allocation2 + $0xf] sm:$0xff]
        %v636 = vld [vmem:[#allocation2 + $0x17] sm:$0xff]
        %v637 = vld [vmem:[#allocation2 + $0x1f] sm:$0xff]
        %v638 = vsel %vm626, 1, 0
        %v639 = vsel %vm627, 1, 0
        %v640 = vsel %vm628, 1, 0
        %v641 = vsel %vm629, 1, 0
        %vm642 = vcmp.eq.s32.totalorder %v638, 1
        %vm643 = vcmp.eq.s32.totalorder %v639, 1
        %vm644 = vcmp.eq.s32.totalorder %v640, 1
        %vm645 = vcmp.eq.s32.totalorder %v641, 1
        %v646 = vsel %vm642, %v634, 0.0
        %v647 = vsel %vm643, %v635, 0.0
        %v648 = vsel %vm644, %v636, 0.0
        %v649 = vsel %vm645, %v637, 0.0
        %v650 = vld [vmem:[#allocation2 + $0x8] sm:$0xff]
        %v651 = vld [vmem:[#allocation2 + $0x10] sm:$0xff]
        %v652 = vld [vmem:[#allocation2 + $0x18] sm:$0xff]
        %v653 = vld [vmem:[#allocation2 + $0x20] sm:$0xff]
        %v654 = vld [vmem:[#allocation2 + $0x9] sm:$0xff]
        %v655 = vld [vmem:[#allocation2 + $0x11] sm:$0xff]
        %v656 = vld [vmem:[#allocation2 + $0x19] sm:$0xff]
        %v657 = vld [vmem:[#allocation2 + $0x21] sm:$0xff]
        %v658 = vsel %vm630, 1, 0
        %v659 = vsel %vm631, 1, 0
        %v660 = vsel %vm632, 1, 0
        %v661 = vsel %vm633, 1, 0
        %vm662 = vcmp.eq.s32.totalorder %v658, 1
        %vm663 = vcmp.eq.s32.totalorder %v659, 1
        %vm664 = vcmp.eq.s32.totalorder %v660, 1
        %vm665 = vcmp.eq.s32.totalorder %v661, 1
        %v666 = vsel %vm662, %v654, 0.0
        %v667 = vsel %vm663, %v655, 0.0
        %v668 = vsel %vm664, %v656, 0.0
        %v669 = vsel %vm665, %v657, 0.0
        %674 = vrot.lane.b32.xlu0 %v650, 4
        %v675 = vpop.permute.xlu0 %674
        %676 = vrot.lane.b32.xlu0 %v651, 4
        %v677 = vpop.permute.xlu0 %676
        %678 = vrot.lane.b32.xlu0 %v652, 4
        %v679 = vpop.permute.xlu0 %678
        %680 = vrot.lane.b32.xlu0 %v653, 4
        %v681 = vpop.permute.xlu0 %680
        %690 = vrot.lane.b32.xlu0 %v666, 8
        %v691 = vpop.permute.xlu0 %690
        %692 = vrot.lane.b32.xlu0 %v667, 8
        %v693 = vpop.permute.xlu0 %692
        %694 = vrot.lane.b32.xlu0 %v668, 8
        %v695 = vpop.permute.xlu0 %694
        %696 = vrot.lane.b32.xlu0 %v669, 8
        %v697 = vpop.permute.xlu0 %696
        %v702 = vsel %vm396, %v646, %v675
        %v703 = vsel %vm396, %v647, %v677
        %v704 = vsel %vm396, %v648, %v679
        %v705 = vsel %vm396, %v649, %v681
        %vm706 = vcmask 64512
        %v707 = vsel %vm706, %v702, %v691
        %v708 = vsel %vm706, %v703, %v693
        %v709 = vsel %vm706, %v704, %v695
        %v710 = vsel %vm706, %v705, %v697
        %v711 = vld [vmem:[%s4] sm:$0xff]
        %v712 = vld [vmem:[%s4 + $0x8] sm:$0xf]
        %v713 = vld [vmem:[#allocation2 + $0x27] sm:$0xff]
        %v714 = vsel %vm642, %v635, 0.0
        %v715 = vsel %vm643, %v636, 0.0
        %v716 = vsel %vm644, %v637, 0.0
        %v717 = vsel %vm645, %v713, 0.0
        %v718 = vld [vmem:[#allocation2 + $0x28] sm:$0xff]
        %v719 = vld [vmem:[#allocation2 + $0x29] sm:$0xff]
        %v720 = vsel %vm662, %v655, 0.0
        %v721 = vsel %vm663, %v656, 0.0
        %v722 = vsel %vm664, %v657, 0.0
        %v723 = vsel %vm665, %v719, 0.0
        %725 = vrot.lane.b32.xlu0 %v718, 4
        %v726 = vpop.permute.xlu0 %725
        %732 = vrot.lane.b32.xlu0 %v720, 8
        %v733 = vpop.permute.xlu0 %732
        %734 = vrot.lane.b32.xlu0 %v721, 8
        %v735 = vpop.permute.xlu0 %734
        %736 = vrot.lane.b32.xlu0 %v722, 8
        %v737 = vpop.permute.xlu0 %736
        %738 = vrot.lane.b32.xlu0 %v723, 8
        %v739 = vpop.permute.xlu0 %738
        %v744 = vsel %vm396, %v714, %v677
        %v745 = vsel %vm396, %v715, %v679
        %v746 = vsel %vm396, %v716, %v681
        %v747 = vsel %vm396, %v717, %v726
        %v748 = vsel %vm706, %v744, %v733
        %v749 = vsel %vm706, %v745, %v735
        %v750 = vsel %vm706, %v746, %v737
        %v751 = vsel %vm706, %v747, %v739
        %s752 = scalar_lea.vmem %s4, 16
        %v753 = vld [vmem:[%s752] sm:$0xff]
        %v754 = vld [vmem:[%s752 + $0x8] sm:$0xf]
        %vm755 = vcmask 97280
        %v757 = vsel %vm755, %v748, 0
        %v760 = vsel %vm755, %v749, 0
        %v763 = vsel %vm755, %v750, 0
        %v766 = vsel %vm755, %v751, 0
        %vm768 = vcmask 1043456
        %v770 = vsel %vm768, %v754, 0
        %772 = vmatpush.msra.mxu0 0.0
        %773 = vmatpush.msra.mxu0 0.0
        %774 = vmatpush.msra.mxu0 0.0
        %775 = vmatpush.msra.mxu0 0.0
        %776 = vmatpush.msra.mxu0 0.0
        %777 = vmatpush.msra.mxu0 0.0
        %778 = vmatpush.msra.mxu0 0.0
        %779 = vmatpush.msra.mxu0 0.0
        %780 = vmatpush.msra.mxu0 0.0
        %781 = vmatpush.msra.mxu0 0.0
        %782 = vmatpush.msra.mxu0 0.0
        %783 = vmatpush.msra.mxu0 0.0
        %784 = vmatpush.msra.mxu0 0.0
        %785 = vmatpush.msra.mxu0 0.0
        %786 = vmatpush.msra.mxu0 %v770
        %787 = vmatpush.msra.mxu0 %v753
        %788 = vmatmul.f32.gmra.mxu0 %v757
        %v789 = vpop.f32.mrf.mxu0
        %v790 = vadd.f32 0.0, %v789
        %791 = vmatmul.f32.gmra.mxu0 %v760
        %v792 = vpop.f32.mrf.mxu0
        %v793 = vadd.f32 0.0, %v792
        %794 = vmatmul.f32.gmra.mxu0 %v763
        %v795 = vpop.f32.mrf.mxu0
        %v796 = vadd.f32 0.0, %v795
        %797 = vmatmul.f32.gmra.mxu0 %v766
        %v798 = vpop.f32.mrf.mxu0
        %v799 = vadd.f32 0.0, %v798
        %800 = vdwg.mxu0
        %v802 = vsel %vm755, %v707, 0
        %v805 = vsel %vm755, %v708, 0
        %v808 = vsel %vm755, %v709, 0
        %v811 = vsel %vm755, %v710, 0
        %v814 = vsel %vm768, %v712, 0
        %816 = vmatpush.msra.mxu0 0.0
        %817 = vmatpush.msra.mxu0 0.0
        %818 = vmatpush.msra.mxu0 0.0
        %819 = vmatpush.msra.mxu0 0.0
        %820 = vmatpush.msra.mxu0 0.0
        %821 = vmatpush.msra.mxu0 0.0
        %822 = vmatpush.msra.mxu0 0.0
        %823 = vmatpush.msra.mxu0 0.0
        %824 = vmatpush.msra.mxu0 0.0
        %825 = vmatpush.msra.mxu0 0.0
        %826 = vmatpush.msra.mxu0 0.0
        %827 = vmatpush.msra.mxu0 0.0
        %828 = vmatpush.msra.mxu0 0.0
        %829 = vmatpush.msra.mxu0 0.0
        %830 = vmatpush.msra.mxu0 %v814
        %831 = vmatpush.msra.mxu0 %v711
        %832 = vmatmul.f32.gmra.mxu0 %v802
        %v833 = vpop.f32.mrf.mxu0
        %v834 = vadd.f32 %v790, %v833
        %835 = vmatmul.f32.gmra.mxu0 %v805
        %v836 = vpop.f32.mrf.mxu0
        %v837 = vadd.f32 %v793, %v836
        %838 = vmatmul.f32.gmra.mxu0 %v808
        %v839 = vpop.f32.mrf.mxu0
        %v840 = vadd.f32 %v796, %v839
        %841 = vmatmul.f32.gmra.mxu0 %v811
        %v842 = vpop.f32.mrf.mxu0
        %v843 = vadd.f32 %v799, %v842
        %844 = vdwg.mxu0
        %v845 = vld [vmem:[#allocation2 + $0x17] sm:$0xff]
        %v846 = vld [vmem:[#allocation2 + $0x1f] sm:$0xff]
        %v847 = vld [vmem:[#allocation2 + $0x27] sm:$0xff]
        %v848 = vld [vmem:[#allocation2 + $0x2f] sm:$0xff]
        %v849 = vsel %vm642, %v845, 0.0
        %v850 = vsel %vm643, %v846, 0.0
        %v851 = vsel %vm644, %v847, 0.0
        %v852 = vsel %vm645, %v848, 0.0
        %v853 = vld [vmem:[#allocation2 + $0x18] sm:$0xff]
        %v854 = vld [vmem:[#allocation2 + $0x20] sm:$0xff]
        %v855 = vld [vmem:[#allocation2 + $0x28] sm:$0xff]
        %v856 = vld [vmem:[#allocation2 + $0x30] sm:$0xff]
        %v857 = vld [vmem:[#allocation2 + $0x19] sm:$0xff]
        %v858 = vld [vmem:[#allocation2 + $0x21] sm:$0xff]
        %v859 = vld [vmem:[#allocation2 + $0x29] sm:$0xff]
        %v860 = vld [vmem:[#allocation2 + $0x31] sm:$0xff]
        %v861 = vsel %vm662, %v857, 0.0
        %v862 = vsel %vm663, %v858, 0.0
        %v863 = vsel %vm664, %v859, 0.0
        %v864 = vsel %vm665, %v860, 0.0
        %869 = vrot.lane.b32.xlu0 %v853, 4
        %v870 = vpop.permute.xlu0 %869
        %871 = vrot.lane.b32.xlu0 %v854, 4
        %v872 = vpop.permute.xlu0 %871
        %873 = vrot.lane.b32.xlu0 %v855, 4
        %v874 = vpop.permute.xlu0 %873
        %875 = vrot.lane.b32.xlu0 %v856, 4
        %v876 = vpop.permute.xlu0 %875
        %885 = vrot.lane.b32.xlu0 %v861, 8
        %v886 = vpop.permute.xlu0 %885
        %887 = vrot.lane.b32.xlu0 %v862, 8
        %v888 = vpop.permute.xlu0 %887
        %889 = vrot.lane.b32.xlu0 %v863, 8
        %v890 = vpop.permute.xlu0 %889
        %891 = vrot.lane.b32.xlu0 %v864, 8
        %v892 = vpop.permute.xlu0 %891
        %v897 = vsel %vm396, %v849, %v870
        %v898 = vsel %vm396, %v850, %v872
        %v899 = vsel %vm396, %v851, %v874
        %v900 = vsel %vm396, %v852, %v876
        %v901 = vsel %vm706, %v897, %v886
        %v902 = vsel %vm706, %v898, %v888
        %v903 = vsel %vm706, %v899, %v890
        %v904 = vsel %vm706, %v900, %v892
        %s905 = scalar_lea.vmem %s4, 32
        %v906 = vld [vmem:[%s905] sm:$0xff]
        %v907 = vld [vmem:[%s905 + $0x8] sm:$0xf]
        %v909 = vsel %vm755, %v901, 0
        %v912 = vsel %vm755, %v902, 0
        %v915 = vsel %vm755, %v903, 0
        %v918 = vsel %vm755, %v904, 0
        %v921 = vsel %vm768, %v907, 0
        %923 = vmatpush.msra.mxu0 0.0
        %924 = vmatpush.msra.mxu0 0.0
        %925 = vmatpush.msra.mxu0 0.0
        %926 = vmatpush.msra.mxu0 0.0
        %927 = vmatpush.msra.mxu0 0.0
        %928 = vmatpush.msra.mxu0 0.0
        %929 = vmatpush.msra.mxu0 0.0
        %930 = vmatpush.msra.mxu0 0.0
        %931 = vmatpush.msra.mxu0 0.0
        %932 = vmatpush.msra.mxu0 0.0
        %933 = vmatpush.msra.mxu0 0.0
        %934 = vmatpush.msra.mxu0 0.0
        %935 = vmatpush.msra.mxu0 0.0
        %936 = vmatpush.msra.mxu0 0.0
        %937 = vmatpush.msra.mxu0 %v921
        %938 = vmatpush.msra.mxu0 %v906
        %939 = vmatmul.f32.gmra.mxu0 %v909
        %v940 = vpop.f32.mrf.mxu0
        %v941 = vadd.f32 0.0, %v940
        %942 = vmatmul.f32.gmra.mxu0 %v912
        %v943 = vpop.f32.mrf.mxu0
        %v944 = vadd.f32 0.0, %v943
        %945 = vmatmul.f32.gmra.mxu0 %v915
        %v946 = vpop.f32.mrf.mxu0
        %v947 = vadd.f32 0.0, %v946
        %948 = vmatmul.f32.gmra.mxu0 %v918
        %v949 = vpop.f32.mrf.mxu0
        %v950 = vadd.f32 0.0, %v949
        %951 = vdwg.mxu0
        %v952 = vadd.f32 %v834, %v941
        %v953 = vadd.f32 %v837, %v944
        %v954 = vadd.f32 %v840, %v947
        %v955 = vadd.f32 %v843, %v950
        %v956 = vld [vmem:[%s5] sm:$0x1]
        %v958 = vperm.slane %v956, 0
        %v960 = vmul.f32 %v952, %v958
        %v961 = vmul.f32 %v953, %v958
        %v962 = vmul.f32 %v954, %v958
        %v963 = vmul.f32 %v955, %v958
        %v964 = vld [vmem:[%s6] sm:$0x1]
        %v966 = vperm.slane %v964, 0
        %v968 = vadd.f32 %v960, %v966
        %v969 = vadd.f32 %v961, %v966
        %v970 = vadd.f32 %v962, %v966
        %v971 = vadd.f32 %v963, %v966
        %v972 = vmax.f32 %v968, 0.0
        %v973 = vmax.f32 %v969, 0.0
        %v974 = vmax.f32 %v970, 0.0
        %v975 = vmax.f32 %v971, 0.0
        %v976 = vld [vmem:[%s7] sm:$0xf]
        %v978 = vsel %vm396, %v972, 0
        %v981 = vsel %vm396, %v973, 0
        %v984 = vsel %vm396, %v974, 0
        %v987 = vsel %vm396, %v975, 0
        %v990 = vsel %vm768, %v976, 0
        %992 = vmatpush.msra.mxu0 0.0
        %993 = vmatpush.msra.mxu0 0.0
        %994 = vmatpush.msra.mxu0 0.0
        %995 = vmatpush.msra.mxu0 0.0
        %996 = vmatpush.msra.mxu0 0.0
        %997 = vmatpush.msra.mxu0 0.0
        %998 = vmatpush.msra.mxu0 0.0
        %999 = vmatpush.msra.mxu0 0.0
        %1000 = vmatpush.msra.mxu0 0.0
        %1001 = vmatpush.msra.mxu0 0.0
        %1002 = vmatpush.msra.mxu0 0.0
        %1003 = vmatpush.msra.mxu0 0.0
        %1004 = vmatpush.msra.mxu0 0.0
        %1005 = vmatpush.msra.mxu0 0.0
        %1006 = vmatpush.msra.mxu0 0.0
        %1007 = vmatpush.msra.mxu0 %v990
        %1008 = vmatmul.f32.gmra.mxu0 %v978
        %v1009 = vpop.f32.mrf.mxu0
        %v1010 = vadd.f32 0.0, %v1009
        %1011 = vmatmul.f32.gmra.mxu0 %v981
        %v1012 = vpop.f32.mrf.mxu0
        %v1013 = vadd.f32 0.0, %v1012
        %1014 = vmatmul.f32.gmra.mxu0 %v984
        %v1015 = vpop.f32.mrf.mxu0
        %v1016 = vadd.f32 0.0, %v1015
        %1017 = vmatmul.f32.gmra.mxu0 %v987
        %v1018 = vpop.f32.mrf.mxu0
        %v1019 = vadd.f32 0.0, %v1018
        %1020 = vdwg.mxu0
        %v1021 = vld [vmem:[%s8] sm:$0x1]
        %v1023 = vperm.slane %v1021, 0
        %v1025 = vmul.f32 %v1010, %v1023
        %v1026 = vmul.f32 %v1013, %v1023
        %v1027 = vmul.f32 %v1016, %v1023
        %v1028 = vmul.f32 %v1019, %v1023
        %v1029 = vld [vmem:[%s9] sm:$0x1]
        %v1031 = vperm.slane %v1029, 0
        %v1033 = vadd.f32 %v1025, %v1031
        %v1034 = vadd.f32 %v1026, %v1031
        %v1035 = vadd.f32 %v1027, %v1031
        %v1036 = vadd.f32 %v1028, %v1031
        %v1037 = vadd.f32 %v1033, %v401
        %v1038 = vadd.f32 %v1034, %v402
        %v1039 = vadd.f32 %v1035, %v403
        %v1040 = vadd.f32 %v1036, %v404
        %v1041 = vmax.f32 %v1037, 0.0
        %v1042 = vmax.f32 %v1038, 0.0
        %v1043 = vmax.f32 %v1039, 0.0
        %v1044 = vmax.f32 %v1040, 0.0
        %1045 = vst.msk [vmem:[%s393] sm:$0xff] %vm407, %v1041
        %1046 = vst.msk [vmem:[%s393 + $0x8] sm:$0xff] %vm407, %v1042
        %1047 = vst.msk [vmem:[%s393 + $0x10] sm:$0xff] %vm407, %v1043
        %1048 = vst.msk [vmem:[%s393 + $0x18] sm:$0xff] %vm407, %v1044
        %s1049 = sand.u32 %s264, 1
        %s1050 = scalar_lea.sflag [#allocation5], %s1049
        %s1051 = sand.u32 %s264, 1
        %s1052 = smul.addr %s1051, 32
        %s1053 = scalar_lea.vmem [#allocation6], %s1052
        // Predicated region
        $region81: #{tpu_custom_call.1} parent=59 // pred_check
          %p1054 = pneg %p274
        $region82: #{tpu_custom_call.1} parent=59 // pred_check_branch
          %1056 = sbr.rel (%p1054) target = $region84
        $region83: #{tpu_custom_call.1} parent=59 // pred_region
          %s1057 = smul.u32 4, %s32
          %1059 = vsyncadd %s1050, 0
          %s1060 = smul.addr %s31, 8
          %s1061 = sadd.s32 %s1057, %s1060
          %s1062 = smul.addr %s1061, 8
          %s1063 = scalar_lea.hbm %s10, %s1062
          %s1064 = sshll.u32 %s1053, 4
          %s1065 = int_to_ptr.vmem [resolvable:$true] %s1064
          %s1066 = sshll.u32 %s1063, 4
          %s1067 = int_to_ptr.hbm [resolvable:$true] %s1066
          %1072 = dma.vmem_to_hbm [thread:$0]  %s1065, 512, %s1067, %s1050, 128, 128, 8
        $region84: #{tpu_custom_call.1} parent=59 // pred_fallthru
          _
      $region60: #{tpu_custom_call.1} parent=5 // pred_fallthru
        _
      %p1073 = scmp.le.s32.totalorder 2, %s22
      // Predicated region
      $region85: #{tpu_custom_call.1} parent=5 // pred_check
        %p1074 = pneg %p1073
      $region86: #{tpu_custom_call.1} parent=5 // pred_check_branch
        %1076 = sbr.rel (%p1074) target = $region88
      $region87: #{tpu_custom_call.1} parent=5 // pred_region
        %s1077 = ssub.s32 %s22, 2
        // Predicated region
        $region89: #{tpu_custom_call.1} parent=87 // pred_check
          %p1078 = pneg %p280
        $region90: #{tpu_custom_call.1} parent=87 // pred_check_branch
          %1080 = sbr.rel (%p1078) target = $region92
        $region91: #{tpu_custom_call.1} parent=87 // pred_region
          %s1081 = sand.u32 %s265, 1
          %s1082 = scalar_lea.sflag [#allocation5], %s1081
          %s1083 = sand.u32 %s265, 1
          %s1084 = smul.addr %s1083, 32
          %s1085 = scalar_lea.vmem [#allocation6], %s1084
          %1087 = dma.done %s1082, 512
        $region92: #{tpu_custom_call.1} parent=87 // pred_fallthru
          _
      $region88: #{tpu_custom_call.1} parent=5 // pred_fallthru
        _
    $region6: #{tpu_custom_call.1} parent=1 // loop_footer
      %s26 = sadd.s32 1, %s22
    $region7: #{tpu_custom_call.1} parent=1 // loop_footer_branch
      %21 = sbr.rel target = $region3
    $region8: #{tpu_custom_call.1} parent=1 // loop_exit
      _
    %1088 = vsyncpa [#allocation4], 1
    %s1089 = scalar_lea.sflag [#allocation4], 1
    %1090 = vsyncpa %s1089, 1
    %1091 = vsyncpa [#allocation5], 1
    %s1092 = scalar_lea.sflag [#allocation5], 1
    %1093 = vsyncpa %s1092, 1

</llo_original>
